<compile_context>
chip_gen: v6e
topology: v6e:2x2x1
jax: 0.10.0
libtpu: 0.0.40
codegen_flags: <defaults>
</compile_context>

<pallas_src>
import functools

import numpy as np

import jax
import jax.numpy as jnp
from jax import lax
from jax.experimental import pallas as pl
from jax.experimental.pallas import tpu as pltpu


# ----------------------------------------------------------------------------
# Pallas kernel: full GGNN recurrence (all time steps) in one invocation.
# ----------------------------------------------------------------------------
def _ggnn_kernel(feats_ref, wu_ref, ww_ref, wc_ref, bias_ref, out_ref, *,
                 time_step, batch, height, ksize, pad):
    # feats_ref : (B*H, W*C)        f32   lane-dense feature state (row=b*H+h, lane=w*C+c)
    # wu_ref    : (K*W*C, 2*W*C)    bf16  block-Toeplitz [update_u | reset_u]
    # ww_ref    : (K*W*C, 3*W*C)    bf16  block-Toeplitz [update_w | reset_w | cur_w]
    # wc_ref    : (K*W*C,   W*C)    bf16  block-Toeplitz cur_memory_u
    # bias_ref  : (3, W*C)          f32   tiled biases [z, r, h]
    # out_ref   : (B*H, W*C)        f32
    BH, WC = feats_ref.shape
    B, H, K, P = batch, height, ksize, pad

    # ---- constants hoisted out of the (unrolled) time loop ------------------
    # Row masks zero the conv halo at top/bottom frame borders; since the H axis
    # is flattened together with batch, they also kill rows that would otherwise
    # leak across a batch boundary.
    hrow = lax.broadcasted_iota(jnp.int32, (BH, WC), 0) % H
    shift_masks = {}
    for ky in range(K):
        dy = ky - P
        if dy > 0:
            shift_masks[dy] = (hrow < H - dy).astype(jnp.float32)
        elif dy < 0:
            shift_masks[dy] = (hrow >= -dy).astype(jnp.float32)

    bz = bias_ref[0:1, :].reshape(1, 1, WC)
    br = bias_ref[1:2, :].reshape(1, 1, WC)
    bh = bias_ref[2:3, :].reshape(1, 1, WC)

    def shift_rows(x, dy):
        # y[(b, h)] = x[(b, h + dy)], zero where h + dy falls outside [0, H).
        if dy == 0:
            return x
        if dy > 0:
            y = jnp.concatenate([x[dy:, :], jnp.zeros((dy, WC), x.dtype)], axis=0)
        else:
            y = jnp.concatenate([jnp.zeros((-dy, WC), x.dtype), x[:dy, :]], axis=0)
        return y * shift_masks[dy]

    def shifted_cat(x):
        # (BH, K*WC): the ky-shifted copies stacked along lanes. Each 128-lane
        # block lands at a 128-aligned lane offset, so the concat is pure vreg
        # placement (no lane shuffles).
        return jnp.concatenate([shift_rows(x, ky - P) for ky in range(K)], axis=-1)

    state = feats_ref[...]                                        # (BH, WC) f32

    for _ in range(time_step):                                    # static unroll
        s_cat = shifted_cat(state)                                # (BH, K*WC) f32
        s_bf = s_cat.astype(jnp.bfloat16)
        # Batch-summed "message" frame (conv is linear -> sum before the matmul).
        frame_bf = jnp.sum(s_cat.reshape(B, H, K * WC), axis=0).astype(jnp.bfloat16)

        # update_u | reset_u on feats                 -> (BH, 2*WC) f32
        au = jnp.dot(s_bf, wu_ref[...], preferred_element_type=jnp.float32)
        # update_w | reset_w | cur_w on the frame     -> (H, 3*WC) f32
        aw = jnp.dot(frame_bf, ww_ref[...], preferred_element_type=jnp.float32)

        au = au.reshape(B, H, 2 * WC)
        zu, ru = au[:, :, :WC], au[:, :, WC:]
        zw = aw[:, 0 * WC:1 * WC].reshape(1, H, WC)
        rw = aw[:, 1 * WC:2 * WC].reshape(1, H, WC)
        hw = aw[:, 2 * WC:3 * WC].reshape(1, H, WC)

        state3 = state.reshape(B, H, WC)
        z = jax.nn.sigmoid(zu + zw + bz)                          # f32 gates
        r = jax.nn.sigmoid(ru + rw + br)

        rf = (r * state3).reshape(BH, WC)
        hu = jnp.dot(shifted_cat(rf).astype(jnp.bfloat16), wc_ref[...],
                     preferred_element_type=jnp.float32)          # (BH, WC)
        hcand = jnp.tanh(hu.reshape(B, H, WC) + hw + bh)

        state = ((1.0 - z) * state3 + z * hcand).reshape(BH, WC)

    out_ref[...] = state                      # single lane-dense full-tile store


# ----------------------------------------------------------------------------
# Wrapper
# ----------------------------------------------------------------------------
def ggnn_forward(x_nchw, weights_torch, biases, *, time_step, kernel_size, padding):
    """GGNN forward pass.

    x_nchw        : (B, C, H, W)          PyTorch NCHW input
    weights_torch : (6, Cout, Cin, K, K)  PyTorch Conv2d weights, ordered
                    [update_w, update_u, reset_w, reset_u, cur_w, cur_u]
    biases        : (6, Cout)
    """
    B, C, H, W = x_nchw.shape
    Co = weights_torch.shape[1]
    K, P = kernel_size, padding
    assert Co == C, "GGNN recurrence requires hidden_dim == input_dim"
    assert 2 * P == K - 1, "kernel assumes 'same' convs (2*padding == kernel_size-1)"
    WC = W * C

    # Lane-dense feature state: row = b*H + h, lane = w*C + c   (W*C = 128 lanes).
    feats = jnp.transpose(x_nchw, (0, 2, 3, 1)).reshape(B * H, WC).astype(jnp.float32)

    # PyTorch OIHW -> HWIO
    w_hwio = jnp.transpose(weights_torch, (0, 3, 4, 2, 1)).astype(jnp.float32)

    # Band indicator for the kx window + zero padding along W:
    #   ind[kx, xi, xo] = 1  iff  xi == xo + kx - P  and  0 <= xi < W
    ind_np = np.zeros((K, W, W), np.float32)
    for kx in range(K):
        for xo in range(W):
            xi = xo + kx - P
            if 0 <= xi < W:
                ind_np[kx, xi, xo] = 1.0
    ind = jnp.asarray(ind_np)

    def toeplitz(w):
        # (K, K, Cin, Cout) conv weight -> (K*W*Cin, W*Cout) block-Toeplitz matrix
        # rows = (ky, xi, cin), columns = (xo, cout); folds kx window + W padding.
        m = jnp.einsum("kio,ykcd->yicod", ind, w)            # (K, W, Cin, W, Cout)
        return m.reshape(K * W * C, W * Co)

    wu = jnp.concatenate([toeplitz(w_hwio[1]), toeplitz(w_hwio[3])],
                         axis=1).astype(jnp.bfloat16)         # (K*WC, 2*WC)
    ww = jnp.concatenate([toeplitz(w_hwio[0]), toeplitz(w_hwio[2]),
                          toeplitz(w_hwio[4])], axis=1).astype(jnp.bfloat16)
    wc = toeplitz(w_hwio[5]).astype(jnp.bfloat16)             # (K*WC, WC)

    b = biases.astype(jnp.float32)
    bias_mat = jnp.stack([jnp.tile(b[0] + b[1], W),           # z gate
                          jnp.tile(b[2] + b[3], W),           # r gate
                          jnp.tile(b[4] + b[5], W)], axis=0)  # h candidate

    kernel = functools.partial(_ggnn_kernel, time_step=time_step, batch=B,
                               height=H, ksize=K, pad=P)
    out2d = pl.pallas_call(
        kernel,
        out_shape=jax.ShapeDtypeStruct((B * H, WC), jnp.float32),
        in_specs=[pl.BlockSpec(memory_space=pltpu.MemorySpace.VMEM) for _ in range(5)],
        out_specs=pl.BlockSpec(memory_space=pltpu.MemorySpace.VMEM),
        compiler_params=pltpu.CompilerParams(vmem_limit_bytes=32 * 1024 * 1024),
    )(feats, wu, ww, wc, bias_mat)
    # TODO(synk): for production shapes (large B*H / W*C), strip-mine H with a
    # haloed grid (dimension_semantics=("parallel",)) or a 2-wide core_map split
    # (exchange the 1-row halo + partial batch-sum per step) so the resident
    # state and Toeplitz weights stay under v7x's 64 MiB VMEM.

    return jnp.transpose(out2d.reshape(B, H, W, C), (0, 3, 1, 2))


# ----------------------------------------------------------------------------
# Pure-JAX reference (for correctness check)
# ----------------------------------------------------------------------------
def _conv_ref(x_nhwc, w_hwio, b, padding):
    y = lax.conv_general_dilated(
        x_nhwc, w_hwio, window_strides=(1, 1),
        padding=((padding, padding), (padding, padding)),
        dimension_numbers=("NHWC", "HWIO", "NHWC"))
    return y + b[None, None, None, :]


def ggnn_reference(x_nchw, weights_torch, biases, *, time_step, kernel_size, padding):
    feats = jnp.transpose(x_nchw, (0, 2, 3, 1)).astype(jnp.float32)
    w_hwio = jnp.transpose(weights_torch, (0, 3, 4, 2, 1))  # (6, K, K, Cin, Cout)
    for _ in range(time_step):
        frame = jnp.sum(feats, axis=0, keepdims=True)
        message = jnp.broadcast_to(frame, feats.shape)
        z = jax.nn.sigmoid(_conv_ref(message, w_hwio[0], biases[0], padding)
                           + _conv_ref(feats, w_hwio[1], biases[1], padding))
        r = jax.nn.sigmoid(_conv_ref(message, w_hwio[2], biases[2], padding)
                           + _conv_ref(feats, w_hwio[3], biases[3], padding))
        h = jnp.tanh(_conv_ref(message, w_hwio[4], biases[4], padding)
                     + _conv_ref(r * feats, w_hwio[5], biases[5], padding))
        feats = (1.0 - z) * feats + z * h
    return jnp.transpose(feats, (0, 3, 1, 2))


# ----------------------------------------------------------------------------
if __name__ == "__main__":
    # Small GGNN config: time_step=3, input_dim=hidden_dim=8, 3x3 conv, pad=1.
    # W*C = 16*8 = 128 -> perfectly lane-dense state of shape (B*H, 128) = (32, 128).
    TIME_STEP = 3
    B, C, H, W = 2, 8, 16, 16
    K, P = 3, 1

    key = jax.random.PRNGKey(0)
    kx, kw, kb = jax.random.split(key, 3)

    x = jax.random.normal(kx, (B, C, H, W), dtype=jnp.float32)          # NCHW input
    # Six convs (update_w, update_u, reset_w, reset_u, cur_w, cur_u), PyTorch layout
    weights = 0.05 * jax.random.normal(kw, (6, C, C, K, K), dtype=jnp.float32)
    biases = 0.05 * jax.random.normal(kb, (6, C), dtype=jnp.float32)

    out = ggnn_forward(x, weights, biases,
                       time_step=TIME_STEP, kernel_size=K, padding=P)
    out = jax.block_until_ready(out)

    ref = ggnn_reference(x, weights, biases,
                         time_step=TIME_STEP, kernel_size=K, padding=P)
    ref = jax.block_until_ready(ref)

    assert out.shape == (B, C, H, W)
    # Tolerance re-baselined for bf16 MXU operands (f32 accumulation, f32 gates).
    max_err = float(jnp.max(jnp.abs(out - ref)))
    assert jnp.allclose(out, ref, atol=3e-2, rtol=3e-2), f"max abs err {max_err}"

    print("KERNEL_OK")
</pallas_src>

<mosaic_0001>
module attributes {stable_mosaic.version = 11 : i64} {
  func.func @_ggnn_kernel(%arg0: memref<32x128xf32, #tpu.memory_space<vmem>>, %arg1: memref<384x256xbf16, #tpu.memory_space<vmem>>, %arg2: memref<384x384xbf16, #tpu.memory_space<vmem>>, %arg3: memref<384x128xbf16, #tpu.memory_space<vmem>>, %arg4: memref<3x128xf32, #tpu.memory_space<vmem>>, %arg5: memref<32x128xf32, #tpu.memory_space<vmem>>) attributes {dimension_semantics = [], scalar_prefetch = 0 : i64, scratch_operands = 0 : i64, tpu.core_type = #tpu.core_type<tc>} {
    %0 = tpu.iota {dimensions = array<i32: 0>} : vector<32x128xi32>
    %c16_i32 = arith.constant 16 : i32
    %c0_i32 = arith.constant 0 : i32
    %1 = arith.cmpi eq, %c16_i32, %c0_i32 : i32
    %c1_i32 = arith.constant 1 : i32
    %2 = arith.select %1, %c1_i32, %c16_i32 : i32
    %3 = vector.broadcast %2 : i32 to vector<32x128xi32>
    %4 = arith.remsi %0, %3 : vector<32x128xi32>
    %c0_i32_0 = arith.constant 0 : i32
    %5 = vector.broadcast %c0_i32_0 : i32 to vector<32x128xi32>
    %6 = arith.cmpi ne, %4, %5 : vector<32x128xi32>
    %c0_i32_1 = arith.constant 0 : i32
    %7 = vector.broadcast %c0_i32_1 : i32 to vector<32x128xi32>
    %8 = arith.cmpi slt, %4, %7 : vector<32x128xi32>
    %c0_i32_2 = arith.constant 0 : i32
    %9 = arith.cmpi slt, %2, %c0_i32_2 : i32
    %10 = vector.broadcast %9 : i1 to vector<32x128xi1>
    %11 = vector.broadcast %10 : vector<32x128xi1> to vector<32x128xi1>
    %12 = arith.xori %8, %11 : vector<32x128xi1>
    %13 = arith.andi %12, %6 : vector<32x128xi1>
    %14 = vector.broadcast %2 : i32 to vector<32x128xi32>
    %15 = arith.addi %4, %14 : vector<32x128xi32>
    %16 = arith.select %13, %15, %4 : vector<32x128xi1>, vector<32x128xi32>
    %c1_i32_3 = arith.constant 1 : i32
    %17 = vector.broadcast %c1_i32_3 : i32 to vector<32x128xi32>
    %18 = arith.cmpi sge, %16, %17 : vector<32x128xi32>
    %19 = arith.extui %18 : vector<32x128xi1> to vector<32x128xi32>
    %20 = arith.sitofp %19 : vector<32x128xi32> to vector<32x128xf32>
    %c15_i32 = arith.constant 15 : i32
    %21 = vector.broadcast %c15_i32 : i32 to vector<32x128xi32>
    %22 = arith.cmpi slt, %16, %21 : vector<32x128xi32>
    %23 = arith.extui %22 : vector<32x128xi1> to vector<32x128xi32>
    %24 = arith.sitofp %23 : vector<32x128xi32> to vector<32x128xf32>
    %c0 = arith.constant 0 : index
    %c0_4 = arith.constant 0 : index
    %25 = vector.load %arg4[%c0, %c0_4] : memref<3x128xf32, #tpu.memory_space<vmem>>, vector<1x128xf32>
    %26 = vector.shape_cast %25 : vector<1x128xf32> to vector<1x1x128xf32>
    %c1 = arith.constant 1 : index
    %c0_5 = arith.constant 0 : index
    %27 = vector.load %arg4[%c1, %c0_5] : memref<3x128xf32, #tpu.memory_space<vmem>>, vector<1x128xf32>
    %28 = vector.shape_cast %27 : vector<1x128xf32> to vector<1x1x128xf32>
    %c2 = arith.constant 2 : index
    %c0_6 = arith.constant 0 : index
    %29 = vector.load %arg4[%c2, %c0_6] : memref<3x128xf32, #tpu.memory_space<vmem>>, vector<1x128xf32>
    %30 = vector.shape_cast %29 : vector<1x128xf32> to vector<1x1x128xf32>
    %c0_7 = arith.constant 0 : index
    %c0_8 = arith.constant 0 : index
    %31 = vector.load %arg0[%c0_7, %c0_8] : memref<32x128xf32, #tpu.memory_space<vmem>>, vector<32x128xf32>
    %cst = arith.constant 0.000000e+00 : f32
    %32 = vector.broadcast %cst : f32 to vector<1x128xf32>
    %33 = vector.extract_strided_slice %31 {offsets = [0, 0], sizes = [31, 128], strides = [1, 1]} : vector<32x128xf32> to vector<31x128xf32>
    %34 = tpu.concatenate %32, %33 in 0 : vector<1x128xf32>, vector<31x128xf32> -> vector<32x128xf32>
    %35 = arith.mulf %34, %20 : vector<32x128xf32>
    %36 = vector.extract_strided_slice %31 {offsets = [1, 0], sizes = [31, 128], strides = [1, 1]} : vector<32x128xf32> to vector<31x128xf32>
    %cst_9 = arith.constant 0.000000e+00 : f32
    %37 = vector.broadcast %cst_9 : f32 to vector<1x128xf32>
    %38 = tpu.concatenate %36, %37 in 0 : vector<31x128xf32>, vector<1x128xf32> -> vector<32x128xf32>
    %39 = arith.mulf %38, %24 : vector<32x128xf32>
    %40 = tpu.concatenate %35, %31, %39 in 1 : vector<32x128xf32>, vector<32x128xf32>, vector<32x128xf32> -> vector<32x384xf32>
    %41 = arith.truncf %40 : vector<32x384xf32> to vector<32x384xbf16>
    %42 = vector.shape_cast %40 : vector<32x384xf32> to vector<2x16x384xf32>
    %cst_10 = arith.constant dense<0.000000e+00> : vector<16x384xf32>
    %43 = vector.multi_reduction <add>, %42, %cst_10 [0] : vector<2x16x384xf32> to vector<16x384xf32>
    %44 = arith.truncf %43 : vector<16x384xf32> to vector<16x384xbf16>
    %c0_11 = arith.constant 0 : index
    %c0_12 = arith.constant 0 : index
    %45 = vector.load %arg1[%c0_11, %c0_12] : memref<384x256xbf16, #tpu.memory_space<vmem>>, vector<384x256xbf16>
    %cst_13 = arith.constant dense<0.000000e+00> : vector<32x256xf32>
    %46 = tpu.matmul %41, %45, %cst_13 {dimension_numbers = #tpu.dot_dimension_numbers<[1], [0], [0], [1], [0, 0, 1, 1], [], []>} : vector<32x384xbf16>, vector<384x256xbf16>, vector<32x256xf32> -> vector<32x256xf32>
    %c0_14 = arith.constant 0 : index
    %c0_15 = arith.constant 0 : index
    %47 = vector.load %arg2[%c0_14, %c0_15] : memref<384x384xbf16, #tpu.memory_space<vmem>>, vector<384x384xbf16>
    %cst_16 = arith.constant dense<0.000000e+00> : vector<16x384xf32>
    %48 = tpu.matmul %44, %47, %cst_16 {dimension_numbers = #tpu.dot_dimension_numbers<[1], [0], [0], [1], [0, 0, 1, 1], [], []>} : vector<16x384xbf16>, vector<384x384xbf16>, vector<16x384xf32> -> vector<16x384xf32>
    %49 = vector.shape_cast %46 : vector<32x256xf32> to vector<2x16x256xf32>
    %50 = vector.extract_strided_slice %49 {offsets = [0, 0, 0], sizes = [2, 16, 128], strides = [1, 1, 1]} : vector<2x16x256xf32> to vector<2x16x128xf32>
    %51 = vector.extract_strided_slice %49 {offsets = [0, 0, 128], sizes = [2, 16, 128], strides = [1, 1, 1]} : vector<2x16x256xf32> to vector<2x16x128xf32>
    %52 = vector.extract_strided_slice %48 {offsets = [0, 0], sizes = [16, 128], strides = [1, 1]} : vector<16x384xf32> to vector<16x128xf32>
    %53 = vector.shape_cast %52 : vector<16x128xf32> to vector<1x16x128xf32>
    %54 = vector.extract_strided_slice %48 {offsets = [0, 128], sizes = [16, 128], strides = [1, 1]} : vector<16x384xf32> to vector<16x128xf32>
    %55 = vector.shape_cast %54 : vector<16x128xf32> to vector<1x16x128xf32>
    %56 = vector.extract_strided_slice %48 {offsets = [0, 256], sizes = [16, 128], strides = [1, 1]} : vector<16x384xf32> to vector<16x128xf32>
    %57 = vector.shape_cast %56 : vector<16x128xf32> to vector<1x16x128xf32>
    %58 = vector.shape_cast %31 : vector<32x128xf32> to vector<2x16x128xf32>
    %59 = vector.broadcast %53 : vector<1x16x128xf32> to vector<2x16x128xf32>
    %60 = arith.addf %50, %59 : vector<2x16x128xf32>
    %61 = vector.broadcast %26 : vector<1x1x128xf32> to vector<2x16x128xf32>
    %62 = arith.addf %60, %61 : vector<2x16x128xf32>
    %63 = arith.negf %62 : vector<2x16x128xf32>
    %64 = math.exp %63 : vector<2x16x128xf32>
    %cst_17 = arith.constant 1.000000e+00 : f32
    %65 = vector.broadcast %cst_17 : f32 to vector<2x16x128xf32>
    %66 = arith.addf %65, %64 : vector<2x16x128xf32>
    %67 = arith.divf %65, %66 : vector<2x16x128xf32>
    %68 = vector.broadcast %55 : vector<1x16x128xf32> to vector<2x16x128xf32>
    %69 = arith.addf %51, %68 : vector<2x16x128xf32>
    %70 = vector.broadcast %28 : vector<1x1x128xf32> to vector<2x16x128xf32>
    %71 = arith.addf %69, %70 : vector<2x16x128xf32>
    %72 = arith.negf %71 : vector<2x16x128xf32>
    %73 = math.exp %72 : vector<2x16x128xf32>
    %cst_18 = arith.constant 1.000000e+00 : f32
    %74 = vector.broadcast %cst_18 : f32 to vector<2x16x128xf32>
    %75 = arith.addf %74, %73 : vector<2x16x128xf32>
    %76 = arith.divf %74, %75 : vector<2x16x128xf32>
    %77 = arith.mulf %76, %58 : vector<2x16x128xf32>
    %78 = vector.shape_cast %77 : vector<2x16x128xf32> to vector<32x128xf32>
    %cst_19 = arith.constant 0.000000e+00 : f32
    %79 = vector.broadcast %cst_19 : f32 to vector<1x128xf32>
    %80 = vector.extract_strided_slice %78 {offsets = [0, 0], sizes = [31, 128], strides = [1, 1]} : vector<32x128xf32> to vector<31x128xf32>
    %81 = tpu.concatenate %79, %80 in 0 : vector<1x128xf32>, vector<31x128xf32> -> vector<32x128xf32>
    %82 = arith.mulf %81, %20 : vector<32x128xf32>
    %83 = vector.extract_strided_slice %78 {offsets = [1, 0], sizes = [31, 128], strides = [1, 1]} : vector<32x128xf32> to vector<31x128xf32>
    %cst_20 = arith.constant 0.000000e+00 : f32
    %84 = vector.broadcast %cst_20 : f32 to vector<1x128xf32>
    %85 = tpu.concatenate %83, %84 in 0 : vector<31x128xf32>, vector<1x128xf32> -> vector<32x128xf32>
    %86 = arith.mulf %85, %24 : vector<32x128xf32>
    %87 = tpu.concatenate %82, %78, %86 in 1 : vector<32x128xf32>, vector<32x128xf32>, vector<32x128xf32> -> vector<32x384xf32>
    %88 = arith.truncf %87 : vector<32x384xf32> to vector<32x384xbf16>
    %c0_21 = arith.constant 0 : index
    %c0_22 = arith.constant 0 : index
    %89 = vector.load %arg3[%c0_21, %c0_22] : memref<384x128xbf16, #tpu.memory_space<vmem>>, vector<384x128xbf16>
    %cst_23 = arith.constant dense<0.000000e+00> : vector<32x128xf32>
    %90 = tpu.matmul %88, %89, %cst_23 {dimension_numbers = #tpu.dot_dimension_numbers<[1], [0], [0], [1], [0, 0, 1, 1], [], []>} : vector<32x384xbf16>, vector<384x128xbf16>, vector<32x128xf32> -> vector<32x128xf32>
    %91 = vector.shape_cast %90 : vector<32x128xf32> to vector<2x16x128xf32>
    %92 = vector.broadcast %57 : vector<1x16x128xf32> to vector<2x16x128xf32>
    %93 = arith.addf %91, %92 : vector<2x16x128xf32>
    %94 = vector.broadcast %30 : vector<1x1x128xf32> to vector<2x16x128xf32>
    %95 = arith.addf %93, %94 : vector<2x16x128xf32>
    %96 = math.tanh %95 : vector<2x16x128xf32>
    %cst_24 = arith.constant 1.000000e+00 : f32
    %97 = vector.broadcast %cst_24 : f32 to vector<2x16x128xf32>
    %98 = arith.subf %97, %67 : vector<2x16x128xf32>
    %99 = arith.mulf %98, %58 : vector<2x16x128xf32>
    %100 = arith.mulf %67, %96 : vector<2x16x128xf32>
    %101 = arith.addf %99, %100 : vector<2x16x128xf32>
    %102 = vector.shape_cast %101 : vector<2x16x128xf32> to vector<32x128xf32>
    %cst_25 = arith.constant 0.000000e+00 : f32
    %103 = vector.broadcast %cst_25 : f32 to vector<1x128xf32>
    %104 = vector.extract_strided_slice %102 {offsets = [0, 0], sizes = [31, 128], strides = [1, 1]} : vector<32x128xf32> to vector<31x128xf32>
    %105 = tpu.concatenate %103, %104 in 0 : vector<1x128xf32>, vector<31x128xf32> -> vector<32x128xf32>
    %106 = arith.mulf %105, %20 : vector<32x128xf32>
    %107 = vector.extract_strided_slice %102 {offsets = [1, 0], sizes = [31, 128], strides = [1, 1]} : vector<32x128xf32> to vector<31x128xf32>
    %cst_26 = arith.constant 0.000000e+00 : f32
    %108 = vector.broadcast %cst_26 : f32 to vector<1x128xf32>
    %109 = tpu.concatenate %107, %108 in 0 : vector<31x128xf32>, vector<1x128xf32> -> vector<32x128xf32>
    %110 = arith.mulf %109, %24 : vector<32x128xf32>
    %111 = tpu.concatenate %106, %102, %110 in 1 : vector<32x128xf32>, vector<32x128xf32>, vector<32x128xf32> -> vector<32x384xf32>
    %112 = arith.truncf %111 : vector<32x384xf32> to vector<32x384xbf16>
    %113 = vector.shape_cast %111 : vector<32x384xf32> to vector<2x16x384xf32>
    %cst_27 = arith.constant dense<0.000000e+00> : vector<16x384xf32>
    %114 = vector.multi_reduction <add>, %113, %cst_27 [0] : vector<2x16x384xf32> to vector<16x384xf32>
    %115 = arith.truncf %114 : vector<16x384xf32> to vector<16x384xbf16>
    %c0_28 = arith.constant 0 : index
    %c0_29 = arith.constant 0 : index
    %116 = vector.load %arg1[%c0_28, %c0_29] : memref<384x256xbf16, #tpu.memory_space<vmem>>, vector<384x256xbf16>
    %cst_30 = arith.constant dense<0.000000e+00> : vector<32x256xf32>
    %117 = tpu.matmul %112, %116, %cst_30 {dimension_numbers = #tpu.dot_dimension_numbers<[1], [0], [0], [1], [0, 0, 1, 1], [], []>} : vector<32x384xbf16>, vector<384x256xbf16>, vector<32x256xf32> -> vector<32x256xf32>
    %c0_31 = arith.constant 0 : index
    %c0_32 = arith.constant 0 : index
    %118 = vector.load %arg2[%c0_31, %c0_32] : memref<384x384xbf16, #tpu.memory_space<vmem>>, vector<384x384xbf16>
    %cst_33 = arith.constant dense<0.000000e+00> : vector<16x384xf32>
    %119 = tpu.matmul %115, %118, %cst_33 {dimension_numbers = #tpu.dot_dimension_numbers<[1], [0], [0], [1], [0, 0, 1, 1], [], []>} : vector<16x384xbf16>, vector<384x384xbf16>, vector<16x384xf32> -> vector<16x384xf32>
    %120 = vector.shape_cast %117 : vector<32x256xf32> to vector<2x16x256xf32>
    %121 = vector.extract_strided_slice %120 {offsets = [0, 0, 0], sizes = [2, 16, 128], strides = [1, 1, 1]} : vector<2x16x256xf32> to vector<2x16x128xf32>
    %122 = vector.extract_strided_slice %120 {offsets = [0, 0, 128], sizes = [2, 16, 128], strides = [1, 1, 1]} : vector<2x16x256xf32> to vector<2x16x128xf32>
    %123 = vector.extract_strided_slice %119 {offsets = [0, 0], sizes = [16, 128], strides = [1, 1]} : vector<16x384xf32> to vector<16x128xf32>
    %124 = vector.shape_cast %123 : vector<16x128xf32> to vector<1x16x128xf32>
    %125 = vector.extract_strided_slice %119 {offsets = [0, 128], sizes = [16, 128], strides = [1, 1]} : vector<16x384xf32> to vector<16x128xf32>
    %126 = vector.shape_cast %125 : vector<16x128xf32> to vector<1x16x128xf32>
    %127 = vector.extract_strided_slice %119 {offsets = [0, 256], sizes = [16, 128], strides = [1, 1]} : vector<16x384xf32> to vector<16x128xf32>
    %128 = vector.shape_cast %127 : vector<16x128xf32> to vector<1x16x128xf32>
    %129 = vector.shape_cast %102 : vector<32x128xf32> to vector<2x16x128xf32>
    %130 = vector.broadcast %124 : vector<1x16x128xf32> to vector<2x16x128xf32>
    %131 = arith.addf %121, %130 : vector<2x16x128xf32>
    %132 = vector.broadcast %26 : vector<1x1x128xf32> to vector<2x16x128xf32>
    %133 = arith.addf %131, %132 : vector<2x16x128xf32>
    %134 = arith.negf %133 : vector<2x16x128xf32>
    %135 = math.exp %134 : vector<2x16x128xf32>
    %cst_34 = arith.constant 1.000000e+00 : f32
    %136 = vector.broadcast %cst_34 : f32 to vector<2x16x128xf32>
    %137 = arith.addf %136, %135 : vector<2x16x128xf32>
    %138 = arith.divf %136, %137 : vector<2x16x128xf32>
    %139 = vector.broadcast %126 : vector<1x16x128xf32> to vector<2x16x128xf32>
    %140 = arith.addf %122, %139 : vector<2x16x128xf32>
    %141 = vector.broadcast %28 : vector<1x1x128xf32> to vector<2x16x128xf32>
    %142 = arith.addf %140, %141 : vector<2x16x128xf32>
    %143 = arith.negf %142 : vector<2x16x128xf32>
    %144 = math.exp %143 : vector<2x16x128xf32>
    %cst_35 = arith.constant 1.000000e+00 : f32
    %145 = vector.broadcast %cst_35 : f32 to vector<2x16x128xf32>
    %146 = arith.addf %145, %144 : vector<2x16x128xf32>
    %147 = arith.divf %145, %146 : vector<2x16x128xf32>
    %148 = arith.mulf %147, %129 : vector<2x16x128xf32>
    %149 = vector.shape_cast %148 : vector<2x16x128xf32> to vector<32x128xf32>
    %cst_36 = arith.constant 0.000000e+00 : f32
    %150 = vector.broadcast %cst_36 : f32 to vector<1x128xf32>
    %151 = vector.extract_strided_slice %149 {offsets = [0, 0], sizes = [31, 128], strides = [1, 1]} : vector<32x128xf32> to vector<31x128xf32>
    %152 = tpu.concatenate %150, %151 in 0 : vector<1x128xf32>, vector<31x128xf32> -> vector<32x128xf32>
    %153 = arith.mulf %152, %20 : vector<32x128xf32>
    %154 = vector.extract_strided_slice %149 {offsets = [1, 0], sizes = [31, 128], strides = [1, 1]} : vector<32x128xf32> to vector<31x128xf32>
    %cst_37 = arith.constant 0.000000e+00 : f32
    %155 = vector.broadcast %cst_37 : f32 to vector<1x128xf32>
    %156 = tpu.concatenate %154, %155 in 0 : vector<31x128xf32>, vector<1x128xf32> -> vector<32x128xf32>
    %157 = arith.mulf %156, %24 : vector<32x128xf32>
    %158 = tpu.concatenate %153, %149, %157 in 1 : vector<32x128xf32>, vector<32x128xf32>, vector<32x128xf32> -> vector<32x384xf32>
    %159 = arith.truncf %158 : vector<32x384xf32> to vector<32x384xbf16>
    %c0_38 = arith.constant 0 : index
    %c0_39 = arith.constant 0 : index
    %160 = vector.load %arg3[%c0_38, %c0_39] : memref<384x128xbf16, #tpu.memory_space<vmem>>, vector<384x128xbf16>
    %cst_40 = arith.constant dense<0.000000e+00> : vector<32x128xf32>
    %161 = tpu.matmul %159, %160, %cst_40 {dimension_numbers = #tpu.dot_dimension_numbers<[1], [0], [0], [1], [0, 0, 1, 1], [], []>} : vector<32x384xbf16>, vector<384x128xbf16>, vector<32x128xf32> -> vector<32x128xf32>
    %162 = vector.shape_cast %161 : vector<32x128xf32> to vector<2x16x128xf32>
    %163 = vector.broadcast %128 : vector<1x16x128xf32> to vector<2x16x128xf32>
    %164 = arith.addf %162, %163 : vector<2x16x128xf32>
    %165 = vector.broadcast %30 : vector<1x1x128xf32> to vector<2x16x128xf32>
    %166 = arith.addf %164, %165 : vector<2x16x128xf32>
    %167 = math.tanh %166 : vector<2x16x128xf32>
    %cst_41 = arith.constant 1.000000e+00 : f32
    %168 = vector.broadcast %cst_41 : f32 to vector<2x16x128xf32>
    %169 = arith.subf %168, %138 : vector<2x16x128xf32>
    %170 = arith.mulf %169, %129 : vector<2x16x128xf32>
    %171 = arith.mulf %138, %167 : vector<2x16x128xf32>
    %172 = arith.addf %170, %171 : vector<2x16x128xf32>
    %173 = vector.shape_cast %172 : vector<2x16x128xf32> to vector<32x128xf32>
    %cst_42 = arith.constant 0.000000e+00 : f32
    %174 = vector.broadcast %cst_42 : f32 to vector<1x128xf32>
    %175 = vector.extract_strided_slice %173 {offsets = [0, 0], sizes = [31, 128], strides = [1, 1]} : vector<32x128xf32> to vector<31x128xf32>
    %176 = tpu.concatenate %174, %175 in 0 : vector<1x128xf32>, vector<31x128xf32> -> vector<32x128xf32>
    %177 = arith.mulf %176, %20 : vector<32x128xf32>
    %178 = vector.extract_strided_slice %173 {offsets = [1, 0], sizes = [31, 128], strides = [1, 1]} : vector<32x128xf32> to vector<31x128xf32>
    %cst_43 = arith.constant 0.000000e+00 : f32
    %179 = vector.broadcast %cst_43 : f32 to vector<1x128xf32>
    %180 = tpu.concatenate %178, %179 in 0 : vector<31x128xf32>, vector<1x128xf32> -> vector<32x128xf32>
    %181 = arith.mulf %180, %24 : vector<32x128xf32>
    %182 = tpu.concatenate %177, %173, %181 in 1 : vector<32x128xf32>, vector<32x128xf32>, vector<32x128xf32> -> vector<32x384xf32>
    %183 = arith.truncf %182 : vector<32x384xf32> to vector<32x384xbf16>
    %184 = vector.shape_cast %182 : vector<32x384xf32> to vector<2x16x384xf32>
    %cst_44 = arith.constant dense<0.000000e+00> : vector<16x384xf32>
    %185 = vector.multi_reduction <add>, %184, %cst_44 [0] : vector<2x16x384xf32> to vector<16x384xf32>
    %186 = arith.truncf %185 : vector<16x384xf32> to vector<16x384xbf16>
    %c0_45 = arith.constant 0 : index
    %c0_46 = arith.constant 0 : index
    %187 = vector.load %arg1[%c0_45, %c0_46] : memref<384x256xbf16, #tpu.memory_space<vmem>>, vector<384x256xbf16>
    %cst_47 = arith.constant dense<0.000000e+00> : vector<32x256xf32>
    %188 = tpu.matmul %183, %187, %cst_47 {dimension_numbers = #tpu.dot_dimension_numbers<[1], [0], [0], [1], [0, 0, 1, 1], [], []>} : vector<32x384xbf16>, vector<384x256xbf16>, vector<32x256xf32> -> vector<32x256xf32>
    %c0_48 = arith.constant 0 : index
    %c0_49 = arith.constant 0 : index
    %189 = vector.load %arg2[%c0_48, %c0_49] : memref<384x384xbf16, #tpu.memory_space<vmem>>, vector<384x384xbf16>
    %cst_50 = arith.constant dense<0.000000e+00> : vector<16x384xf32>
    %190 = tpu.matmul %186, %189, %cst_50 {dimension_numbers = #tpu.dot_dimension_numbers<[1], [0], [0], [1], [0, 0, 1, 1], [], []>} : vector<16x384xbf16>, vector<384x384xbf16>, vector<16x384xf32> -> vector<16x384xf32>
    %191 = vector.shape_cast %188 : vector<32x256xf32> to vector<2x16x256xf32>
    %192 = vector.extract_strided_slice %191 {offsets = [0, 0, 0], sizes = [2, 16, 128], strides = [1, 1, 1]} : vector<2x16x256xf32> to vector<2x16x128xf32>
    %193 = vector.extract_strided_slice %191 {offsets = [0, 0, 128], sizes = [2, 16, 128], strides = [1, 1, 1]} : vector<2x16x256xf32> to vector<2x16x128xf32>
    %194 = vector.extract_strided_slice %190 {offsets = [0, 0], sizes = [16, 128], strides = [1, 1]} : vector<16x384xf32> to vector<16x128xf32>
    %195 = vector.shape_cast %194 : vector<16x128xf32> to vector<1x16x128xf32>
    %196 = vector.extract_strided_slice %190 {offsets = [0, 128], sizes = [16, 128], strides = [1, 1]} : vector<16x384xf32> to vector<16x128xf32>
    %197 = vector.shape_cast %196 : vector<16x128xf32> to vector<1x16x128xf32>
    %198 = vector.extract_strided_slice %190 {offsets = [0, 256], sizes = [16, 128], strides = [1, 1]} : vector<16x384xf32> to vector<16x128xf32>
    %199 = vector.shape_cast %198 : vector<16x128xf32> to vector<1x16x128xf32>
    %200 = vector.shape_cast %173 : vector<32x128xf32> to vector<2x16x128xf32>
    %201 = vector.broadcast %195 : vector<1x16x128xf32> to vector<2x16x128xf32>
    %202 = arith.addf %192, %201 : vector<2x16x128xf32>
    %203 = vector.broadcast %26 : vector<1x1x128xf32> to vector<2x16x128xf32>
    %204 = arith.addf %202, %203 : vector<2x16x128xf32>
    %205 = arith.negf %204 : vector<2x16x128xf32>
    %206 = math.exp %205 : vector<2x16x128xf32>
    %cst_51 = arith.constant 1.000000e+00 : f32
    %207 = vector.broadcast %cst_51 : f32 to vector<2x16x128xf32>
    %208 = arith.addf %207, %206 : vector<2x16x128xf32>
    %209 = arith.divf %207, %208 : vector<2x16x128xf32>
    %210 = vector.broadcast %197 : vector<1x16x128xf32> to vector<2x16x128xf32>
    %211 = arith.addf %193, %210 : vector<2x16x128xf32>
    %212 = vector.broadcast %28 : vector<1x1x128xf32> to vector<2x16x128xf32>
    %213 = arith.addf %211, %212 : vector<2x16x128xf32>
    %214 = arith.negf %213 : vector<2x16x128xf32>
    %215 = math.exp %214 : vector<2x16x128xf32>
    %cst_52 = arith.constant 1.000000e+00 : f32
    %216 = vector.broadcast %cst_52 : f32 to vector<2x16x128xf32>
    %217 = arith.addf %216, %215 : vector<2x16x128xf32>
    %218 = arith.divf %216, %217 : vector<2x16x128xf32>
    %219 = arith.mulf %218, %200 : vector<2x16x128xf32>
    %220 = vector.shape_cast %219 : vector<2x16x128xf32> to vector<32x128xf32>
    %cst_53 = arith.constant 0.000000e+00 : f32
    %221 = vector.broadcast %cst_53 : f32 to vector<1x128xf32>
    %222 = vector.extract_strided_slice %220 {offsets = [0, 0], sizes = [31, 128], strides = [1, 1]} : vector<32x128xf32> to vector<31x128xf32>
    %223 = tpu.concatenate %221, %222 in 0 : vector<1x128xf32>, vector<31x128xf32> -> vector<32x128xf32>
    %224 = arith.mulf %223, %20 : vector<32x128xf32>
    %225 = vector.extract_strided_slice %220 {offsets = [1, 0], sizes = [31, 128], strides = [1, 1]} : vector<32x128xf32> to vector<31x128xf32>
    %cst_54 = arith.constant 0.000000e+00 : f32
    %226 = vector.broadcast %cst_54 : f32 to vector<1x128xf32>
    %227 = tpu.concatenate %225, %226 in 0 : vector<31x128xf32>, vector<1x128xf32> -> vector<32x128xf32>
    %228 = arith.mulf %227, %24 : vector<32x128xf32>
    %229 = tpu.concatenate %224, %220, %228 in 1 : vector<32x128xf32>, vector<32x128xf32>, vector<32x128xf32> -> vector<32x384xf32>
    %230 = arith.truncf %229 : vector<32x384xf32> to vector<32x384xbf16>
    %c0_55 = arith.constant 0 : index
    %c0_56 = arith.constant 0 : index
    %231 = vector.load %arg3[%c0_55, %c0_56] : memref<384x128xbf16, #tpu.memory_space<vmem>>, vector<384x128xbf16>
    %cst_57 = arith.constant dense<0.000000e+00> : vector<32x128xf32>
    %232 = tpu.matmul %230, %231, %cst_57 {dimension_numbers = #tpu.dot_dimension_numbers<[1], [0], [0], [1], [0, 0, 1, 1], [], []>} : vector<32x384xbf16>, vector<384x128xbf16>, vector<32x128xf32> -> vector<32x128xf32>
    %233 = vector.shape_cast %232 : vector<32x128xf32> to vector<2x16x128xf32>
    %234 = vector.broadcast %199 : vector<1x16x128xf32> to vector<2x16x128xf32>
    %235 = arith.addf %233, %234 : vector<2x16x128xf32>
    %236 = vector.broadcast %30 : vector<1x1x128xf32> to vector<2x16x128xf32>
    %237 = arith.addf %235, %236 : vector<2x16x128xf32>
    %238 = math.tanh %237 : vector<2x16x128xf32>
    %cst_58 = arith.constant 1.000000e+00 : f32
    %239 = vector.broadcast %cst_58 : f32 to vector<2x16x128xf32>
    %240 = arith.subf %239, %209 : vector<2x16x128xf32>
    %241 = arith.mulf %240, %200 : vector<2x16x128xf32>
    %242 = arith.mulf %209, %238 : vector<2x16x128xf32>
    %243 = arith.addf %241, %242 : vector<2x16x128xf32>
    %244 = vector.shape_cast %243 : vector<2x16x128xf32> to vector<32x128xf32>
    %c0_59 = arith.constant 0 : index
    %c0_60 = arith.constant 0 : index
    %245 = vector.load %arg5[%c0_59, %c0_60] : memref<32x128xf32, #tpu.memory_space<vmem>>, vector<32x128xf32>
    tpu.vector_store %arg5[%c0_59, %c0_60], %244 {strides = array<i32>} : memref<32x128xf32, #tpu.memory_space<vmem>>, vector<32x128xf32>,
    return
  }
}

</mosaic_0001>

<llo_original>
// kernel: tpu_custom_call.1
$region0: #{tpu_custom_call.1}
  #allocation0 [shape = 'u32[]', space=smem, size = 0x4, offset = 0x4, fixed_abs, tag = 'smem constant byte address 0x4 - core index']
  #allocation1 [shape = 'u32[144,128]{1,0:T(1,128)}', space=vmem, size = 0x12000, scoped, tag = 'internal scratch']
  %s0 = inlined_call_operand.hbm [shape: f32[32,128], index: 0, kind: input, shape index: {}]
  %s1 = inlined_call_operand.hbm [shape: bf16[384,256], index: 1, kind: input, shape index: {}]
  %s2 = inlined_call_operand.hbm [shape: bf16[384,384], index: 2, kind: input, shape index: {}]
  %s3 = inlined_call_operand.hbm [shape: bf16[384,128], index: 3, kind: input, shape index: {}]
  %s4 = inlined_call_operand.vmem [shape: f32[3,128], index: 4, kind: input, shape index: {}]
  %s5 = inlined_call_operand.hbm [shape: f32[32,128], index: 5, kind: output, shape index: {}]
  %s6 = sld [smem:[#allocation0]]
  $region46: #{tpu_custom_call.1} parent=0
    _
  %s8 = ssub.s32 1, %s6
  %s9 = scalar_select 0, %s8, %s6
  $region1: #{tpu_custom_call.1} parent=0
    #allocation2 [shape = 'u8[16384]{0}', space=vmem, size = 0x4000, scoped, tag = 'input window, operand 0, single buffered']
    #allocation3 [shape = 's32[1]{0}', space=sflag, size = 0x4, scoped, tag = 'scoped memory for tpu_custom_call.1']
    #allocation4 [shape = 's32[1]{0}', space=sflag, size = 0x4, scoped, tag = 'scoped memory for tpu_custom_call.1']
    #allocation5 [shape = 'u8[196608]{0}', space=vmem, size = 0x30000, scoped, tag = 'input window, operand 1, single buffered']
    #allocation6 [shape = 's32[1]{0}', space=sflag, size = 0x4, scoped, tag = 'scoped memory for tpu_custom_call.1']
    #allocation7 [shape = 'u8[294912]{0}', space=vmem, size = 0x48000, scoped, tag = 'input window, operand 2, single buffered']
    #allocation8 [shape = 'u8[98304]{0}', space=vmem, size = 0x18000, scoped, tag = 'input window, operand 3, single buffered']
    #allocation9 [shape = 's32[1]{0}', space=sflag, size = 0x4, scoped, tag = 'scoped memory for tpu_custom_call.1']
    #allocation10 [shape = 'u8[16384]{0}', space=vmem, size = 0x4000, scoped, tag = 'output window, operand 0, single buffered']
    %10 = vsyncpa [#allocation3], 0
    %11 = vsyncpa [#allocation6], 0
    %12 = vsyncpa [#allocation9], 0
    %13 = vsyncpa [#allocation4], 0
    // Predicated region
    $region2: #{tpu_custom_call.1} parent=1 // pred_check
      _
    $region3: #{tpu_custom_call.1} parent=1 // pred_check_branch
      %15 = sbr.rel (0) target = $region5
    $region4: #{tpu_custom_call.1} parent=1 // pred_region
      %s17 = ssub.s32 512, 512
      %18 = vsyncadd [#allocation3], %s17
      %s19 = sshll.u32 [#allocation2], 4
      %s20 = int_to_ptr.vmem [resolvable:$true] %s19
      %25 = dma.hbm_to_vmem [thread:$0]  %s0, 512, %s20, [#allocation3], 128, 128, 8
    $region5: #{tpu_custom_call.1} parent=1 // pred_fallthru
      _
    // Predicated region
    $region6: #{tpu_custom_call.1} parent=1 // pred_check
      _
    $region7: #{tpu_custom_call.1} parent=1 // pred_check_branch
      %27 = sbr.rel (0) target = $region9
    $region8: #{tpu_custom_call.1} parent=1 // pred_region
      %s29 = ssub.s32 6144, 6144
      %30 = vsyncadd [#allocation6], %s29
      %s31 = sshll.u32 [#allocation5], 4
      %s32 = int_to_ptr.vmem [resolvable:$true] %s31
      %37 = dma.hbm_to_vmem [thread:$0]  %s1, 6144, %s32, [#allocation6], 128, 128, 8
    $region9: #{tpu_custom_call.1} parent=1 // pred_fallthru
      _
    // Predicated region
    $region10: #{tpu_custom_call.1} parent=1 // pred_check
      _
    $region11: #{tpu_custom_call.1} parent=1 // pred_check_branch
      %39 = sbr.rel (0) target = $region13
    $region12: #{tpu_custom_call.1} parent=1 // pred_region
      %s41 = ssub.s32 9216, 9216
      %42 = vsyncadd [#allocation6], %s41
      %s43 = sshll.u32 [#allocation7], 4
      %s44 = int_to_ptr.vmem [resolvable:$true] %s43
      %49 = dma.hbm_to_vmem [thread:$0]  %s2, 9216, %s44, [#allocation6], 192, 192, 12
    $region13: #{tpu_custom_call.1} parent=1 // pred_fallthru
      _
    // Predicated region
    $region14: #{tpu_custom_call.1} parent=1 // pred_check
      _
    $region15: #{tpu_custom_call.1} parent=1 // pred_check_branch
      %51 = sbr.rel (0) target = $region17
    $region16: #{tpu_custom_call.1} parent=1 // pred_region
      %s53 = ssub.s32 3072, 3072
      %54 = vsyncadd [#allocation9], %s53
      %s55 = sshll.u32 [#allocation8], 4
      %s56 = int_to_ptr.vmem [resolvable:$true] %s55
      %61 = dma.hbm_to_vmem [thread:$0]  %s3, 3072, %s56, [#allocation9], 64, 64, 4
    $region17: #{tpu_custom_call.1} parent=1 // pred_fallthru
      _
    // Predicated region
    $region18: #{tpu_custom_call.1} parent=1 // pred_check
      _
    $region19: #{tpu_custom_call.1} parent=1 // pred_check_branch
      %63 = sbr.rel (0) target = $region21
    $region20: #{tpu_custom_call.1} parent=1 // pred_region
      _
    $region21: #{tpu_custom_call.1} parent=1 // pred_fallthru
      _
    // Predicated region
    $region22: #{tpu_custom_call.1} parent=1 // pred_check
      _
    $region23: #{tpu_custom_call.1} parent=1 // pred_check_branch
      %65 = sbr.rel (0) target = $region25
    $region24: #{tpu_custom_call.1} parent=1 // pred_region
      %66 = dma.done [#allocation3], 512
    $region25: #{tpu_custom_call.1} parent=1 // pred_fallthru
      _
    // Predicated region
    $region26: #{tpu_custom_call.1} parent=1 // pred_check
      _
    $region27: #{tpu_custom_call.1} parent=1 // pred_check_branch
      %68 = sbr.rel (0) target = $region29
    $region28: #{tpu_custom_call.1} parent=1 // pred_region
      %69 = dma.done [#allocation6], 6144
    $region29: #{tpu_custom_call.1} parent=1 // pred_fallthru
      _
    // Predicated region
    $region30: #{tpu_custom_call.1} parent=1 // pred_check
      _
    $region31: #{tpu_custom_call.1} parent=1 // pred_check_branch
      %71 = sbr.rel (0) target = $region33
    $region32: #{tpu_custom_call.1} parent=1 // pred_region
      %72 = dma.done [#allocation6], 9216
    $region33: #{tpu_custom_call.1} parent=1 // pred_fallthru
      _
    // Predicated region
    $region34: #{tpu_custom_call.1} parent=1 // pred_check
      _
    $region35: #{tpu_custom_call.1} parent=1 // pred_check_branch
      %74 = sbr.rel (0) target = $region37
    $region36: #{tpu_custom_call.1} parent=1 // pred_region
      %75 = dma.done [#allocation9], 3072
    $region37: #{tpu_custom_call.1} parent=1 // pred_fallthru
      _
    %v77 = vlaneseq
    %v78 = vshrl.u32 %v77, 7
    %v79 = vadd.s32 %v78, 8
    %v80 = vadd.s32 %v78, 16
    %v81 = vadd.s32 %v78, 24
    %vm82 = vcmp.lt.s32.totalorder %v78, 0
    %v83 = vsub.s32 0, %v78
    %v84 = vsel %vm82, %v83, %v78
    %v85 = vshrl.u32 %v84, 4
    %v86 = vand.u32 %v84, 15
    %v87 = vsub.s32 0, %v86
    %v88 = vsel %vm82, %v87, %v86
    %vm89 = vcmp.lt.s32.totalorder %v79, 0
    %v90 = vsub.s32 0, %v79
    %v91 = vsel %vm89, %v90, %v79
    %v92 = vshrl.u32 %v91, 4
    %v93 = vand.u32 %v91, 15
    %v94 = vsub.s32 0, %v93
    %v95 = vsel %vm89, %v94, %v93
    %vm96 = vcmp.lt.s32.totalorder %v80, 0
    %v97 = vsub.s32 0, %v80
    %v98 = vsel %vm96, %v97, %v80
    %v99 = vshrl.u32 %v98, 4
    %v100 = vand.u32 %v98, 15
    %v101 = vsub.s32 0, %v100
    %v102 = vsel %vm96, %v101, %v100
    %vm103 = vcmp.lt.s32.totalorder %v81, 0
    %v104 = vsub.s32 0, %v81
    %v105 = vsel %vm103, %v104, %v81
    %v106 = vshrl.u32 %v105, 4
    %v107 = vand.u32 %v105, 15
    %v108 = vsub.s32 0, %v107
    %v109 = vsel %vm103, %v108, %v107
    %vm110 = vcmp.ne.s32.totalorder %v88, 0
    %vm111 = vcmp.ne.s32.totalorder %v95, 0
    %vm112 = vcmp.ne.s32.totalorder %v102, 0
    %vm113 = vcmp.ne.s32.totalorder %v109, 0
    %vm114 = vcmp.lt.s32.totalorder %v88, 0
    %vm115 = vcmp.lt.s32.totalorder %v95, 0
    %vm116 = vcmp.lt.s32.totalorder %v102, 0
    %vm117 = vcmp.lt.s32.totalorder %v109, 0
    %vm118 = vmand %vm114, %vm110
    %vm119 = vmand %vm115, %vm111
    %vm120 = vmand %vm116, %vm112
    %vm121 = vmand %vm117, %vm113
    %v122 = vadd.s32 %v88, 16
    %v123 = vadd.s32 %v95, 16
    %v124 = vadd.s32 %v102, 16
    %v125 = vadd.s32 %v109, 16
    %v126 = vsel %vm118, %v122, %v88
    %v127 = vsel %vm119, %v123, %v95
    %v128 = vsel %vm120, %v124, %v102
    %v129 = vsel %vm121, %v125, %v109
    %vm130 = vcmp.ge.s32.totalorder %v126, 1
    %vm131 = vcmp.ge.s32.totalorder %v127, 1
    %vm132 = vcmp.ge.s32.totalorder %v128, 1
    %vm133 = vcmp.ge.s32.totalorder %v129, 1
    %v134 = vsel %vm130, 1, 0
    %v135 = vsel %vm131, 1, 0
    %v136 = vsel %vm132, 1, 0
    %v137 = vsel %vm133, 1, 0
    %v138 = vcvt.s32.f32 %v134
    %v139 = vcvt.s32.f32 %v135
    %v140 = vcvt.s32.f32 %v136
    %v141 = vcvt.s32.f32 %v137
    %vm142 = vcmp.lt.s32.totalorder %v126, 15
    %vm143 = vcmp.lt.s32.totalorder %v127, 15
    %vm144 = vcmp.lt.s32.totalorder %v128, 15
    %vm145 = vcmp.lt.s32.totalorder %v129, 15
    %v146 = vsel %vm142, 1, 0
    %v147 = vsel %vm143, 1, 0
    %v148 = vsel %vm144, 1, 0
    %v149 = vsel %vm145, 1, 0
    %v150 = vcvt.s32.f32 %v146
    %v151 = vcvt.s32.f32 %v147
    %v152 = vcvt.s32.f32 %v148
    %v153 = vcvt.s32.f32 %v149
    %v154 = vld [vmem:[%s4] sm:$0x1]
    %v155 = vld [vmem:[%s4 + $0x1] sm:$0x1]
    %v156 = vld [vmem:[%s4 + $0x2] sm:$0x1]
    %v157 = vld [vmem:[#allocation2] sm:$0xff]
    %v158 = vld [vmem:[#allocation2 + $0x8] sm:$0xff]
    %v159 = vld [vmem:[#allocation2 + $0x10] sm:$0xff]
    %v160 = vld [vmem:[#allocation2 + $0x18] sm:$0xff]
    %vm165 = vcmask 1040384
    %v166 = vrot.slane %v157, 7
    %v167 = vrot.slane %v158, 7
    %v168 = vsel %vm165, %v166, %v167
    %v169 = vrot.slane %v159, 7
    %v170 = vsel %vm165, %v167, %v169
    %v171 = vrot.slane %v160, 7
    %v172 = vsel %vm165, %v169, %v171
    %v177 = vsel %vm165, 0.0, %v166
    %v178 = vmul.f32 %v177, %v138
    %v179 = vmul.f32 %v168, %v139
    %v180 = vmul.f32 %v170, %v140
    %v181 = vmul.f32 %v172, %v141
    %vm182 = vcmask 1046528
    %v183 = vrot.slane %v157, 1
    %v184 = vrot.slane %v158, 1
    %v185 = vsel %vm182, %v183, %v184
    %v186 = vrot.slane %v159, 1
    %v187 = vsel %vm182, %v184, %v186
    %v188 = vrot.slane %v160, 1
    %v189 = vsel %vm182, %v186, %v188
    %v194 = vsel %vm182, %v188, 0.0
    %v195 = vmul.f32 %v185, %v150
    %v196 = vmul.f32 %v187, %v151
    %v197 = vmul.f32 %v189, %v152
    %v198 = vmul.f32 %v194, %v153
    %v199 = vpack.c.bf16 %v179, %v178
    %v200 = vpack.c.bf16 %v158, %v157
    %v201 = vpack.c.bf16 %v196, %v195
    %v202 = vpack.c.bf16 %v181, %v180
    %v203 = vpack.c.bf16 %v160, %v159
    %v204 = vpack.c.bf16 %v198, %v197
    %v205 = vadd.f32 %v178, %v180
    %v206 = vadd.f32 %v157, %v159
    %v207 = vadd.f32 %v195, %v197
    %v208 = vadd.f32 %v179, %v181
    %v209 = vadd.f32 %v158, %v160
    %v210 = vadd.f32 %v196, %v198
    %v211 = vpack.c.bf16 %v208, %v205
    %v212 = vpack.c.bf16 %v209, %v206
    %v213 = vpack.c.bf16 %v210, %v207
    %v214 = vld [vmem:[#allocation5] sm:$0xff]
    %v215 = vld [vmem:[#allocation5 + $0x8] sm:$0xff]
    %v216 = vld [vmem:[#allocation5 + $0x10] sm:$0xff]
    %v217 = vld [vmem:[#allocation5 + $0x18] sm:$0xff]
    %v218 = vld [vmem:[#allocation5 + $0x20] sm:$0xff]
    %v219 = vld [vmem:[#allocation5 + $0x28] sm:$0xff]
    %v220 = vld [vmem:[#allocation5 + $0x30] sm:$0xff]
    %v221 = vld [vmem:[#allocation5 + $0x38] sm:$0xff]
    %v222 = vld [vmem:[#allocation5 + $0x40] sm:$0xff]
    %v223 = vld [vmem:[#allocation5 + $0x48] sm:$0xff]
    %v224 = vld [vmem:[#allocation5 + $0x50] sm:$0xff]
    %v225 = vld [vmem:[#allocation5 + $0x58] sm:$0xff]
    %v226 = vld [vmem:[#allocation5 + $0x60] sm:$0xff]
    %v227 = vld [vmem:[#allocation5 + $0x68] sm:$0xff]
    %v228 = vld [vmem:[#allocation5 + $0x70] sm:$0xff]
    %v229 = vld [vmem:[#allocation5 + $0x78] sm:$0xff]
    %v230 = vld [vmem:[#allocation5 + $0x80] sm:$0xff]
    %v231 = vld [vmem:[#allocation5 + $0x88] sm:$0xff]
    %v232 = vld [vmem:[#allocation5 + $0x90] sm:$0xff]
    %v233 = vld [vmem:[#allocation5 + $0x98] sm:$0xff]
    %v234 = vld [vmem:[#allocation5 + $0xa0] sm:$0xff]
    %v235 = vld [vmem:[#allocation5 + $0xa8] sm:$0xff]
    %v236 = vld [vmem:[#allocation5 + $0xb0] sm:$0xff]
    %v237 = vld [vmem:[#allocation5 + $0xb8] sm:$0xff]
    %v238 = vld [vmem:[#allocation5 + $0xc0] sm:$0xff]
    %v239 = vld [vmem:[#allocation5 + $0xc8] sm:$0xff]
    %v240 = vld [vmem:[#allocation5 + $0xd0] sm:$0xff]
    %v241 = vld [vmem:[#allocation5 + $0xd8] sm:$0xff]
    %v242 = vld [vmem:[#allocation5 + $0xe0] sm:$0xff]
    %v243 = vld [vmem:[#allocation5 + $0xe8] sm:$0xff]
    %v244 = vld [vmem:[#allocation5 + $0xf0] sm:$0xff]
    %v245 = vld [vmem:[#allocation5 + $0xf8] sm:$0xff]
    %v246 = vld [vmem:[#allocation5 + $0x100] sm:$0xff]
    %v247 = vld [vmem:[#allocation5 + $0x108] sm:$0xff]
    %v248 = vld [vmem:[#allocation5 + $0x110] sm:$0xff]
    %v249 = vld [vmem:[#allocation5 + $0x118] sm:$0xff]
    %v250 = vld [vmem:[#allocation5 + $0x120] sm:$0xff]
    %v251 = vld [vmem:[#allocation5 + $0x128] sm:$0xff]
    %v252 = vld [vmem:[#allocation5 + $0x130] sm:$0xff]
    %v253 = vld [vmem:[#allocation5 + $0x138] sm:$0xff]
    %v254 = vld [vmem:[#allocation5 + $0x140] sm:$0xff]
    %v255 = vld [vmem:[#allocation5 + $0x148] sm:$0xff]
    %v256 = vld [vmem:[#allocation5 + $0x150] sm:$0xff]
    %v257 = vld [vmem:[#allocation5 + $0x158] sm:$0xff]
    %v258 = vld [vmem:[#allocation5 + $0x160] sm:$0xff]
    %v259 = vld [vmem:[#allocation5 + $0x168] sm:$0xff]
    %v260 = vld [vmem:[#allocation5 + $0x170] sm:$0xff]
    %v261 = vld [vmem:[#allocation5 + $0x178] sm:$0xff]
    %v310 = vunpack.c.l.b16 %v214
    %v311 = vunpack.c.h.b16 %v214
    %v312 = vunpack.c.l.b16 %v215
    %v313 = vunpack.c.h.b16 %v215
    %v314 = vunpack.c.l.b16 %v216
    %v315 = vunpack.c.h.b16 %v216
    %v316 = vunpack.c.l.b16 %v217
    %v317 = vunpack.c.h.b16 %v217
    %v318 = vunpack.c.l.b16 %v218
    %v319 = vunpack.c.h.b16 %v218
    %v320 = vunpack.c.l.b16 %v219
    %v321 = vunpack.c.h.b16 %v219
    %v322 = vunpack.c.l.b16 %v220
    %v323 = vunpack.c.h.b16 %v220
    %v324 = vunpack.c.l.b16 %v221
    %v325 = vunpack.c.h.b16 %v221
    %v326 = vunpack.c.l.b16 %v222
    %v327 = vunpack.c.h.b16 %v222
    %v328 = vunpack.c.l.b16 %v223
    %v329 = vunpack.c.h.b16 %v223
    %v330 = vunpack.c.l.b16 %v224
    %v331 = vunpack.c.h.b16 %v224
    %v332 = vunpack.c.l.b16 %v225
    %v333 = vunpack.c.h.b16 %v225
    %v334 = vunpack.c.l.b16 %v226
    %v335 = vunpack.c.h.b16 %v226
    %v336 = vunpack.c.l.b16 %v227
    %v337 = vunpack.c.h.b16 %v227
    %v338 = vunpack.c.l.b16 %v228
    %v339 = vunpack.c.h.b16 %v228
    %v340 = vunpack.c.l.b16 %v229
    %v341 = vunpack.c.h.b16 %v229
    %v342 = vunpack.c.l.b16 %v230
    %v343 = vunpack.c.h.b16 %v230
    %v344 = vunpack.c.l.b16 %v231
    %v345 = vunpack.c.h.b16 %v231
    %v346 = vunpack.c.l.b16 %v232
    %v347 = vunpack.c.h.b16 %v232
    %v348 = vunpack.c.l.b16 %v233
    %v349 = vunpack.c.h.b16 %v233
    %v350 = vunpack.c.l.b16 %v234
    %v351 = vunpack.c.h.b16 %v234
    %v352 = vunpack.c.l.b16 %v235
    %v353 = vunpack.c.h.b16 %v235
    %v354 = vunpack.c.l.b16 %v236
    %v355 = vunpack.c.h.b16 %v236
    %v356 = vunpack.c.l.b16 %v237
    %v357 = vunpack.c.h.b16 %v237
    %v358 = vunpack.c.l.b16 %v238
    %v359 = vunpack.c.h.b16 %v238
    %v360 = vunpack.c.l.b16 %v239
    %v361 = vunpack.c.h.b16 %v239
    %v362 = vunpack.c.l.b16 %v240
    %v363 = vunpack.c.h.b16 %v240
    %v364 = vunpack.c.l.b16 %v241
    %v365 = vunpack.c.h.b16 %v241
    %v366 = vunpack.c.l.b16 %v242
    %v367 = vunpack.c.h.b16 %v242
    %v368 = vunpack.c.l.b16 %v243
    %v369 = vunpack.c.h.b16 %v243
    %v370 = vunpack.c.l.b16 %v244
    %v371 = vunpack.c.h.b16 %v244
    %v372 = vunpack.c.l.b16 %v245
    %v373 = vunpack.c.h.b16 %v245
    %v374 = vunpack.c.l.b16 %v246
    %v375 = vunpack.c.h.b16 %v246
    %v376 = vunpack.c.l.b16 %v247
    %v377 = vunpack.c.h.b16 %v247
    %v378 = vunpack.c.l.b16 %v248
    %v379 = vunpack.c.h.b16 %v248
    %v380 = vunpack.c.l.b16 %v249
    %v381 = vunpack.c.h.b16 %v249
    %v382 = vunpack.c.l.b16 %v250
    %v383 = vunpack.c.h.b16 %v250
    %v384 = vunpack.c.l.b16 %v251
    %v385 = vunpack.c.h.b16 %v251
    %v386 = vunpack.c.l.b16 %v252
    %v387 = vunpack.c.h.b16 %v252
    %v388 = vunpack.c.l.b16 %v253
    %v389 = vunpack.c.h.b16 %v253
    %v390 = vunpack.c.l.b16 %v254
    %v391 = vunpack.c.h.b16 %v254
    %v392 = vunpack.c.l.b16 %v255
    %v393 = vunpack.c.h.b16 %v255
    %v394 = vunpack.c.l.b16 %v256
    %v395 = vunpack.c.h.b16 %v256
    %v396 = vunpack.c.l.b16 %v257
    %v397 = vunpack.c.h.b16 %v257
    %v398 = vunpack.c.l.b16 %v258
    %v399 = vunpack.c.h.b16 %v258
    %v400 = vunpack.c.l.b16 %v259
    %v401 = vunpack.c.h.b16 %v259
    %v402 = vunpack.c.l.b16 %v260
    %v403 = vunpack.c.h.b16 %v260
    %v404 = vunpack.c.l.b16 %v261
    %v405 = vunpack.c.h.b16 %v261
    %v406 = vpack.c.b16 %v312, %v310
    %v407 = vpack.c.b16 %v313, %v311
    %v408 = vpack.c.b16 %v316, %v314
    %v409 = vpack.c.b16 %v317, %v315
    %v410 = vpack.c.b16 %v320, %v318
    %v411 = vpack.c.b16 %v321, %v319
    %v412 = vpack.c.b16 %v324, %v322
    %v413 = vpack.c.b16 %v325, %v323
    %v414 = vpack.c.b16 %v328, %v326
    %v415 = vpack.c.b16 %v329, %v327
    %v416 = vpack.c.b16 %v332, %v330
    %v417 = vpack.c.b16 %v333, %v331
    %v418 = vpack.c.b16 %v336, %v334
    %v419 = vpack.c.b16 %v337, %v335
    %v420 = vpack.c.b16 %v340, %v338
    %v421 = vpack.c.b16 %v341, %v339
    %v422 = vpack.c.b16 %v344, %v342
    %v423 = vpack.c.b16 %v345, %v343
    %v424 = vpack.c.b16 %v348, %v346
    %v425 = vpack.c.b16 %v349, %v347
    %v426 = vpack.c.b16 %v352, %v350
    %v427 = vpack.c.b16 %v353, %v351
    %v428 = vpack.c.b16 %v356, %v354
    %v429 = vpack.c.b16 %v357, %v355
    %v430 = vpack.c.b16 %v360, %v358
    %v431 = vpack.c.b16 %v361, %v359
    %v432 = vpack.c.b16 %v364, %v362
    %v433 = vpack.c.b16 %v365, %v363
    %v434 = vpack.c.b16 %v368, %v366
    %v435 = vpack.c.b16 %v369, %v367
    %v436 = vpack.c.b16 %v372, %v370
    %v437 = vpack.c.b16 %v373, %v371
    %v438 = vpack.c.b16 %v376, %v374
    %v439 = vpack.c.b16 %v377, %v375
    %v440 = vpack.c.b16 %v380, %v378
    %v441 = vpack.c.b16 %v381, %v379
    %v442 = vpack.c.b16 %v384, %v382
    %v443 = vpack.c.b16 %v385, %v383
    %v444 = vpack.c.b16 %v388, %v386
    %v445 = vpack.c.b16 %v389, %v387
    %v446 = vpack.c.b16 %v392, %v390
    %v447 = vpack.c.b16 %v393, %v391
    %v448 = vpack.c.b16 %v396, %v394
    %v449 = vpack.c.b16 %v397, %v395
    %v450 = vpack.c.b16 %v400, %v398
    %v451 = vpack.c.b16 %v401, %v399
    %v452 = vpack.c.b16 %v404, %v402
    %v453 = vpack.c.b16 %v405, %v403
    %502 = vmatprep.subr.bf16.mxu0 %v421
    %503 = vmatpush1.bf16.msra.mxu0 %v420
    %504 = vmatprep.subr.bf16.mxu0 %v419
    %505 = vmatpush1.bf16.msra.mxu0 %v418
    %506 = vmatprep.subr.bf16.mxu0 %v417
    %507 = vmatpush1.bf16.msra.mxu0 %v416
    %508 = vmatprep.subr.bf16.mxu0 %v415
    %509 = vmatpush1.bf16.msra.mxu0 %v414
    %510 = vmatprep.subr.bf16.mxu0 %v413
    %511 = vmatpush1.bf16.msra.mxu0 %v412
    %512 = vmatprep.subr.bf16.mxu0 %v411
    %513 = vmatpush1.bf16.msra.mxu0 %v410
    %514 = vmatprep.subr.bf16.mxu0 %v409
    %515 = vmatpush1.bf16.msra.mxu0 %v408
    %516 = vmatprep.subr.bf16.mxu0 %v407
    %517 = vmatpush1.bf16.msra.mxu0 %v406
    %518 = vmatprep.subr.bf16.mxu0 %v437
    %519 = vmatpush2.bf16.msra.mxu0 %v436
    %520 = vmatprep.subr.bf16.mxu0 %v435
    %521 = vmatpush2.bf16.msra.mxu0 %v434
    %522 = vmatprep.subr.bf16.mxu0 %v433
    %523 = vmatpush2.bf16.msra.mxu0 %v432
    %524 = vmatprep.subr.bf16.mxu0 %v431
    %525 = vmatpush2.bf16.msra.mxu0 %v430
    %526 = vmatprep.subr.bf16.mxu0 %v429
    %527 = vmatpush2.bf16.msra.mxu0 %v428
    %528 = vmatprep.subr.bf16.mxu0 %v427
    %529 = vmatpush2.bf16.msra.mxu0 %v426
    %530 = vmatprep.subr.bf16.mxu0 %v425
    %531 = vmatpush2.bf16.msra.mxu0 %v424
    %532 = vmatprep.subr.bf16.mxu0 %v423
    %533 = vmatpush2.bf16.msra.mxu0 %v422
    %534 = vmatprep.mubr.bf16.mxu0 %v200
    %535 = vmatmul.mubr.bf16.gmra.mxu0 %v199
    %v536 = vpop.f32.mrf.mxu0
    %v537 = vadd.f32 0.0, %v536
    %v538 = vpop.f32.mrf.mxu0
    %v539 = vadd.f32 0.0, %v538
    %v540 = vpop.f32.mrf.mxu0
    %v541 = vadd.f32 0.0, %v540
    %v542 = vpop.f32.mrf.mxu0
    %v543 = vadd.f32 0.0, %v542
    %544 = vmatprep.mubr.bf16.mxu0 %v203
    %545 = vmatmul.mubr.bf16.gmra.mxu0 %v202
    %v546 = vpop.f32.mrf.mxu0
    %v547 = vadd.f32 0.0, %v546
    %v548 = vpop.f32.mrf.mxu0
    %v549 = vadd.f32 0.0, %v548
    %v550 = vpop.f32.mrf.mxu0
    %v551 = vadd.f32 0.0, %v550
    %v552 = vpop.f32.mrf.mxu0
    %v553 = vadd.f32 0.0, %v552
    %554 = vdwg.mxu0
    %555 = vmatprep.subr.bf16.mxu0 %v453
    %556 = vmatpush1.bf16.msra.mxu0 %v452
    %557 = vmatprep.subr.bf16.mxu0 %v451
    %558 = vmatpush1.bf16.msra.mxu0 %v450
    %559 = vmatprep.subr.bf16.mxu0 %v449
    %560 = vmatpush1.bf16.msra.mxu0 %v448
    %561 = vmatprep.subr.bf16.mxu0 %v447
    %562 = vmatpush1.bf16.msra.mxu0 %v446
    %563 = vmatprep.subr.bf16.mxu0 %v445
    %564 = vmatpush1.bf16.msra.mxu0 %v444
    %565 = vmatprep.subr.bf16.mxu0 %v443
    %566 = vmatpush1.bf16.msra.mxu0 %v442
    %567 = vmatprep.subr.bf16.mxu0 %v441
    %568 = vmatpush1.bf16.msra.mxu0 %v440
    %569 = vmatprep.subr.bf16.mxu0 %v439
    %570 = vmatpush1.bf16.msra.mxu0 %v438
    %571 = vmatprep.subr.bf16.mxu0 0
    %572 = vmatpush2.bf16.msra.mxu0 0
    %573 = vmatprep.subr.bf16.mxu0 0
    %574 = vmatpush2.bf16.msra.mxu0 0
    %575 = vmatprep.subr.bf16.mxu0 0
    %576 = vmatpush2.bf16.msra.mxu0 0
    %577 = vmatprep.subr.bf16.mxu0 0
    %578 = vmatpush2.bf16.msra.mxu0 0
    %579 = vmatprep.subr.bf16.mxu0 0
    %580 = vmatpush2.bf16.msra.mxu0 0
    %581 = vmatprep.subr.bf16.mxu0 0
    %582 = vmatpush2.bf16.msra.mxu0 0
    %583 = vmatprep.subr.bf16.mxu0 0
    %584 = vmatpush2.bf16.msra.mxu0 0
    %585 = vmatprep.subr.bf16.mxu0 0
    %586 = vmatpush2.bf16.msra.mxu0 0
    %587 = vmatprep.mubr.bf16.mxu0 0
    %588 = vmatmul.mubr.bf16.gmra.mxu0 %v201
    %v589 = vpop.f32.mrf.mxu0
    %v590 = vadd.f32 %v537, %v589
    %v591 = vpop.f32.mrf.mxu0
    %v592 = vadd.f32 %v539, %v591
    %v593 = vpop.f32.mrf.mxu0
    %v594 = vadd.f32 %v541, %v593
    %v595 = vpop.f32.mrf.mxu0
    %v596 = vadd.f32 %v543, %v595
    %597 = vmatprep.mubr.bf16.mxu0 0
    %598 = vmatmul.mubr.bf16.gmra.mxu0 %v204
    %v599 = vpop.f32.mrf.mxu0
    %v600 = vadd.f32 %v547, %v599
    %v601 = vpop.f32.mrf.mxu0
    %v602 = vadd.f32 %v549, %v601
    %v603 = vpop.f32.mrf.mxu0
    %v604 = vadd.f32 %v551, %v603
    %v605 = vpop.f32.mrf.mxu0
    %v606 = vadd.f32 %v553, %v605
    %607 = vdwg.mxu0
    %v608 = vld [vmem:[#allocation7] sm:$0xff]
    %v609 = vld [vmem:[#allocation7 + $0x8] sm:$0xf]
    %v610 = vld [vmem:[#allocation7 + $0xc] sm:$0xff]
    %v611 = vld [vmem:[#allocation7 + $0x14] sm:$0xf]
    %v612 = vld [vmem:[#allocation7 + $0x18] sm:$0xff]
    %v613 = vld [vmem:[#allocation7 + $0x20] sm:$0xf]
    %v614 = vld [vmem:[#allocation7 + $0x24] sm:$0xff]
    %v615 = vld [vmem:[#allocation7 + $0x2c] sm:$0xf]
    %v616 = vld [vmem:[#allocation7 + $0x30] sm:$0xff]
    %v617 = vld [vmem:[#allocation7 + $0x38] sm:$0xf]
    %v618 = vld [vmem:[#allocation7 + $0x3c] sm:$0xff]
    %v619 = vld [vmem:[#allocation7 + $0x44] sm:$0xf]
    %v620 = vld [vmem:[#allocation7 + $0x48] sm:$0xff]
    %v621 = vld [vmem:[#allocation7 + $0x50] sm:$0xf]
    %v622 = vld [vmem:[#allocation7 + $0x54] sm:$0xff]
    %v623 = vld [vmem:[#allocation7 + $0x5c] sm:$0xf]
    %v624 = vld [vmem:[#allocation7 + $0x60] sm:$0xff]
    %v625 = vld [vmem:[#allocation7 + $0x68] sm:$0xf]
    %v626 = vld [vmem:[#allocation7 + $0x6c] sm:$0xff]
    %v627 = vld [vmem:[#allocation7 + $0x74] sm:$0xf]
    %v628 = vld [vmem:[#allocation7 + $0x78] sm:$0xff]
    %v629 = vld [vmem:[#allocation7 + $0x80] sm:$0xf]
    %v630 = vld [vmem:[#allocation7 + $0x84] sm:$0xff]
    %v631 = vld [vmem:[#allocation7 + $0x8c] sm:$0xf]
    %v632 = vld [vmem:[#allocation7 + $0x90] sm:$0xff]
    %v633 = vld [vmem:[#allocation7 + $0x98] sm:$0xf]
    %v634 = vld [vmem:[#allocation7 + $0x9c] sm:$0xff]
    %v635 = vld [vmem:[#allocation7 + $0xa4] sm:$0xf]
    %v636 = vld [vmem:[#allocation7 + $0xa8] sm:$0xff]
    %v637 = vld [vmem:[#allocation7 + $0xb0] sm:$0xf]
    %v638 = vld [vmem:[#allocation7 + $0xb4] sm:$0xff]
    %v639 = vld [vmem:[#allocation7 + $0xbc] sm:$0xf]
    %v640 = vld [vmem:[#allocation7 + $0xc0] sm:$0xff]
    %v641 = vld [vmem:[#allocation7 + $0xc8] sm:$0xf]
    %v642 = vld [vmem:[#allocation7 + $0xcc] sm:$0xff]
    %v643 = vld [vmem:[#allocation7 + $0xd4] sm:$0xf]
    %v644 = vld [vmem:[#allocation7 + $0xd8] sm:$0xff]
    %v645 = vld [vmem:[#allocation7 + $0xe0] sm:$0xf]
    %v646 = vld [vmem:[#allocation7 + $0xe4] sm:$0xff]
    %v647 = vld [vmem:[#allocation7 + $0xec] sm:$0xf]
    %v648 = vld [vmem:[#allocation7 + $0xf0] sm:$0xff]
    %v649 = vld [vmem:[#allocation7 + $0xf8] sm:$0xf]
    %v650 = vld [vmem:[#allocation7 + $0xfc] sm:$0xff]
    %v651 = vld [vmem:[#allocation7 + $0x104] sm:$0xf]
    %v652 = vld [vmem:[#allocation7 + $0x108] sm:$0xff]
    %v653 = vld [vmem:[#allocation7 + $0x110] sm:$0xf]
    %v654 = vld [vmem:[#allocation7 + $0x114] sm:$0xff]
    %v655 = vld [vmem:[#allocation7 + $0x11c] sm:$0xf]
    %v656 = vld [vmem:[#allocation7 + $0x120] sm:$0xff]
    %v657 = vld [vmem:[#allocation7 + $0x128] sm:$0xf]
    %v658 = vld [vmem:[#allocation7 + $0x12c] sm:$0xff]
    %v659 = vld [vmem:[#allocation7 + $0x134] sm:$0xf]
    %v660 = vld [vmem:[#allocation7 + $0x138] sm:$0xff]
    %v661 = vld [vmem:[#allocation7 + $0x140] sm:$0xf]
    %v662 = vld [vmem:[#allocation7 + $0x144] sm:$0xff]
    %v663 = vld [vmem:[#allocation7 + $0x14c] sm:$0xf]
    %v664 = vld [vmem:[#allocation7 + $0x150] sm:$0xff]
    %v665 = vld [vmem:[#allocation7 + $0x158] sm:$0xf]
    %v666 = vld [vmem:[#allocation7 + $0x15c] sm:$0xff]
    %v667 = vld [vmem:[#allocation7 + $0x164] sm:$0xf]
    %v668 = vld [vmem:[#allocation7 + $0x168] sm:$0xff]
    %v669 = vld [vmem:[#allocation7 + $0x170] sm:$0xf]
    %v670 = vld [vmem:[#allocation7 + $0x174] sm:$0xff]
    %v671 = vld [vmem:[#allocation7 + $0x17c] sm:$0xf]
    %v672 = vld [vmem:[#allocation7 + $0x180] sm:$0xff]
    %v673 = vld [vmem:[#allocation7 + $0x188] sm:$0xf]
    %v674 = vld [vmem:[#allocation7 + $0x18c] sm:$0xff]
    %v675 = vld [vmem:[#allocation7 + $0x194] sm:$0xf]
    %v676 = vld [vmem:[#allocation7 + $0x198] sm:$0xff]
    %v677 = vld [vmem:[#allocation7 + $0x1a0] sm:$0xf]
    %v678 = vld [vmem:[#allocation7 + $0x1a4] sm:$0xff]
    %v679 = vld [vmem:[#allocation7 + $0x1ac] sm:$0xf]
    %v680 = vld [vmem:[#allocation7 + $0x1b0] sm:$0xff]
    %v681 = vld [vmem:[#allocation7 + $0x1b8] sm:$0xf]
    %v682 = vld [vmem:[#allocation7 + $0x1bc] sm:$0xff]
    %v683 = vld [vmem:[#allocation7 + $0x1c4] sm:$0xf]
    %v684 = vld [vmem:[#allocation7 + $0x1c8] sm:$0xff]
    %v685 = vld [vmem:[#allocation7 + $0x1d0] sm:$0xf]
    %v686 = vld [vmem:[#allocation7 + $0x1d4] sm:$0xff]
    %v687 = vld [vmem:[#allocation7 + $0x1dc] sm:$0xf]
    %v688 = vld [vmem:[#allocation7 + $0x1e0] sm:$0xff]
    %v689 = vld [vmem:[#allocation7 + $0x1e8] sm:$0xf]
    %v690 = vld [vmem:[#allocation7 + $0x1ec] sm:$0xff]
    %v691 = vld [vmem:[#allocation7 + $0x1f4] sm:$0xf]
    %v692 = vld [vmem:[#allocation7 + $0x1f8] sm:$0xff]
    %v693 = vld [vmem:[#allocation7 + $0x200] sm:$0xf]
    %v694 = vld [vmem:[#allocation7 + $0x204] sm:$0xff]
    %v695 = vld [vmem:[#allocation7 + $0x20c] sm:$0xf]
    %v696 = vld [vmem:[#allocation7 + $0x210] sm:$0xff]
    %v697 = vld [vmem:[#allocation7 + $0x218] sm:$0xf]
    %v698 = vld [vmem:[#allocation7 + $0x21c] sm:$0xff]
    %v699 = vld [vmem:[#allocation7 + $0x224] sm:$0xf]
    %v700 = vld [vmem:[#allocation7 + $0x228] sm:$0xff]
    %v701 = vld [vmem:[#allocation7 + $0x230] sm:$0xf]
    %v702 = vld [vmem:[#allocation7 + $0x234] sm:$0xff]
    %v703 = vld [vmem:[#allocation7 + $0x23c] sm:$0xf]
    %v800 = vunpack.c.l.b16 %v608
    %v801 = vunpack.c.h.b16 %v608
    %v802 = vunpack.c.l.b16 %v609
    %v803 = vunpack.c.l.b16 %v610
    %v804 = vunpack.c.h.b16 %v610
    %v805 = vunpack.c.l.b16 %v611
    %v806 = vunpack.c.l.b16 %v612
    %v807 = vunpack.c.h.b16 %v612
    %v808 = vunpack.c.l.b16 %v613
    %v809 = vunpack.c.l.b16 %v614
    %v810 = vunpack.c.h.b16 %v614
    %v811 = vunpack.c.l.b16 %v615
    %v812 = vunpack.c.l.b16 %v616
    %v813 = vunpack.c.h.b16 %v616
    %v814 = vunpack.c.l.b16 %v617
    %v815 = vunpack.c.l.b16 %v618
    %v816 = vunpack.c.h.b16 %v618
    %v817 = vunpack.c.l.b16 %v619
    %v818 = vunpack.c.l.b16 %v620
    %v819 = vunpack.c.h.b16 %v620
    %v820 = vunpack.c.l.b16 %v621
    %v821 = vunpack.c.l.b16 %v622
    %v822 = vunpack.c.h.b16 %v622
    %v823 = vunpack.c.l.b16 %v623
    %v824 = vunpack.c.l.b16 %v624
    %v825 = vunpack.c.h.b16 %v624
    %v826 = vunpack.c.l.b16 %v625
    %v827 = vunpack.c.l.b16 %v626
    %v828 = vunpack.c.h.b16 %v626
    %v829 = vunpack.c.l.b16 %v627
    %v830 = vunpack.c.l.b16 %v628
    %v831 = vunpack.c.h.b16 %v628
    %v832 = vunpack.c.l.b16 %v629
    %v833 = vunpack.c.l.b16 %v630
    %v834 = vunpack.c.h.b16 %v630
    %v835 = vunpack.c.l.b16 %v631
    %v836 = vunpack.c.l.b16 %v632
    %v837 = vunpack.c.h.b16 %v632
    %v838 = vunpack.c.l.b16 %v633
    %v839 = vunpack.c.l.b16 %v634
    %v840 = vunpack.c.h.b16 %v634
    %v841 = vunpack.c.l.b16 %v635
    %v842 = vunpack.c.l.b16 %v636
    %v843 = vunpack.c.h.b16 %v636
    %v844 = vunpack.c.l.b16 %v637
    %v845 = vunpack.c.l.b16 %v638
    %v846 = vunpack.c.h.b16 %v638
    %v847 = vunpack.c.l.b16 %v639
    %v848 = vunpack.c.l.b16 %v640
    %v849 = vunpack.c.h.b16 %v640
    %v850 = vunpack.c.l.b16 %v641
    %v851 = vunpack.c.l.b16 %v642
    %v852 = vunpack.c.h.b16 %v642
    %v853 = vunpack.c.l.b16 %v643
    %v854 = vunpack.c.l.b16 %v644
    %v855 = vunpack.c.h.b16 %v644
    %v856 = vunpack.c.l.b16 %v645
    %v857 = vunpack.c.l.b16 %v646
    %v858 = vunpack.c.h.b16 %v646
    %v859 = vunpack.c.l.b16 %v647
    %v860 = vunpack.c.l.b16 %v648
    %v861 = vunpack.c.h.b16 %v648
    %v862 = vunpack.c.l.b16 %v649
    %v863 = vunpack.c.l.b16 %v650
    %v864 = vunpack.c.h.b16 %v650
    %v865 = vunpack.c.l.b16 %v651
    %v866 = vunpack.c.l.b16 %v652
    %v867 = vunpack.c.h.b16 %v652
    %v868 = vunpack.c.l.b16 %v653
    %v869 = vunpack.c.l.b16 %v654
    %v870 = vunpack.c.h.b16 %v654
    %v871 = vunpack.c.l.b16 %v655
    %v872 = vunpack.c.l.b16 %v656
    %v873 = vunpack.c.h.b16 %v656
    %v874 = vunpack.c.l.b16 %v657
    %v875 = vunpack.c.l.b16 %v658
    %v876 = vunpack.c.h.b16 %v658
    %v877 = vunpack.c.l.b16 %v659
    %v878 = vunpack.c.l.b16 %v660
    %v879 = vunpack.c.h.b16 %v660
    %v880 = vunpack.c.l.b16 %v661
    %v881 = vunpack.c.l.b16 %v662
    %v882 = vunpack.c.h.b16 %v662
    %v883 = vunpack.c.l.b16 %v663
    %v884 = vunpack.c.l.b16 %v664
    %v885 = vunpack.c.h.b16 %v664
    %v886 = vunpack.c.l.b16 %v665
    %v887 = vunpack.c.l.b16 %v666
    %v888 = vunpack.c.h.b16 %v666
    %v889 = vunpack.c.l.b16 %v667
    %v890 = vunpack.c.l.b16 %v668
    %v891 = vunpack.c.h.b16 %v668
    %v892 = vunpack.c.l.b16 %v669
    %v893 = vunpack.c.l.b16 %v670
    %v894 = vunpack.c.h.b16 %v670
    %v895 = vunpack.c.l.b16 %v671
    %v896 = vunpack.c.l.b16 %v672
    %v897 = vunpack.c.h.b16 %v672
    %v898 = vunpack.c.l.b16 %v673
    %v899 = vunpack.c.l.b16 %v674
    %v900 = vunpack.c.h.b16 %v674
    %v901 = vunpack.c.l.b16 %v675
    %v902 = vunpack.c.l.b16 %v676
    %v903 = vunpack.c.h.b16 %v676
    %v904 = vunpack.c.l.b16 %v677
    %v905 = vunpack.c.l.b16 %v678
    %v906 = vunpack.c.h.b16 %v678
    %v907 = vunpack.c.l.b16 %v679
    %v908 = vunpack.c.l.b16 %v680
    %v909 = vunpack.c.h.b16 %v680
    %v910 = vunpack.c.l.b16 %v681
    %v911 = vunpack.c.l.b16 %v682
    %v912 = vunpack.c.h.b16 %v682
    %v913 = vunpack.c.l.b16 %v683
    %v914 = vunpack.c.l.b16 %v684
    %v915 = vunpack.c.h.b16 %v684
    %v916 = vunpack.c.l.b16 %v685
    %v917 = vunpack.c.l.b16 %v686
    %v918 = vunpack.c.h.b16 %v686
    %v919 = vunpack.c.l.b16 %v687
    %v920 = vunpack.c.l.b16 %v688
    %v921 = vunpack.c.h.b16 %v688
    %v922 = vunpack.c.l.b16 %v689
    %v923 = vunpack.c.l.b16 %v690
    %v924 = vunpack.c.h.b16 %v690
    %v925 = vunpack.c.l.b16 %v691
    %v926 = vunpack.c.l.b16 %v692
    %v927 = vunpack.c.h.b16 %v692
    %v928 = vunpack.c.l.b16 %v693
    %v929 = vunpack.c.l.b16 %v694
    %v930 = vunpack.c.h.b16 %v694
    %v931 = vunpack.c.l.b16 %v695
    %v932 = vunpack.c.l.b16 %v696
    %v933 = vunpack.c.h.b16 %v696
    %v934 = vunpack.c.l.b16 %v697
    %v935 = vunpack.c.l.b16 %v698
    %v936 = vunpack.c.h.b16 %v698
    %v937 = vunpack.c.l.b16 %v699
    %v938 = vunpack.c.l.b16 %v700
    %v939 = vunpack.c.h.b16 %v700
    %v940 = vunpack.c.l.b16 %v701
    %v941 = vunpack.c.l.b16 %v702
    %v942 = vunpack.c.h.b16 %v702
    %v943 = vunpack.c.l.b16 %v703
    %v944 = vpack.c.b16 %v803, %v800
    %v945 = vpack.c.b16 %v804, %v801
    %v946 = vpack.c.b16 %v805, %v802
    %v947 = vpack.c.b16 %v809, %v806
    %v948 = vpack.c.b16 %v810, %v807
    %v949 = vpack.c.b16 %v811, %v808
    %v950 = vpack.c.b16 %v815, %v812
    %v951 = vpack.c.b16 %v816, %v813
    %v952 = vpack.c.b16 %v817, %v814
    %v953 = vpack.c.b16 %v821, %v818
    %v954 = vpack.c.b16 %v822, %v819
    %v955 = vpack.c.b16 %v823, %v820
    %v956 = vpack.c.b16 %v827, %v824
    %v957 = vpack.c.b16 %v828, %v825
    %v958 = vpack.c.b16 %v829, %v826
    %v959 = vpack.c.b16 %v833, %v830
    %v960 = vpack.c.b16 %v834, %v831
    %v961 = vpack.c.b16 %v835, %v832
    %v962 = vpack.c.b16 %v839, %v836
    %v963 = vpack.c.b16 %v840, %v837
    %v964 = vpack.c.b16 %v841, %v838
    %v965 = vpack.c.b16 %v845, %v842
    %v966 = vpack.c.b16 %v846, %v843
    %v967 = vpack.c.b16 %v847, %v844
    %v968 = vpack.c.b16 %v851, %v848
    %v969 = vpack.c.b16 %v852, %v849
    %v970 = vpack.c.b16 %v853, %v850
    %v971 = vpack.c.b16 %v857, %v854
    %v972 = vpack.c.b16 %v858, %v855
    %v973 = vpack.c.b16 %v859, %v856
    %v974 = vpack.c.b16 %v863, %v860
    %v975 = vpack.c.b16 %v864, %v861
    %v976 = vpack.c.b16 %v865, %v862
    %v977 = vpack.c.b16 %v869, %v866
    %v978 = vpack.c.b16 %v870, %v867
    %v979 = vpack.c.b16 %v871, %v868
    %v980 = vpack.c.b16 %v875, %v872
    %v981 = vpack.c.b16 %v876, %v873
    %v982 = vpack.c.b16 %v877, %v874
    %v983 = vpack.c.b16 %v881, %v878
    %v984 = vpack.c.b16 %v882, %v879
    %v985 = vpack.c.b16 %v883, %v880
    %v986 = vpack.c.b16 %v887, %v884
    %v987 = vpack.c.b16 %v888, %v885
    %v988 = vpack.c.b16 %v889, %v886
    %v989 = vpack.c.b16 %v893, %v890
    %v990 = vpack.c.b16 %v894, %v891
    %v991 = vpack.c.b16 %v895, %v892
    %v992 = vpack.c.b16 %v899, %v896
    %v993 = vpack.c.b16 %v900, %v897
    %v994 = vpack.c.b16 %v901, %v898
    %v995 = vpack.c.b16 %v905, %v902
    %v996 = vpack.c.b16 %v906, %v903
    %v997 = vpack.c.b16 %v907, %v904
    %v998 = vpack.c.b16 %v911, %v908
    %v999 = vpack.c.b16 %v912, %v909
    %v1000 = vpack.c.b16 %v913, %v910
    %v1001 = vpack.c.b16 %v917, %v914
    %v1002 = vpack.c.b16 %v918, %v915
    %v1003 = vpack.c.b16 %v919, %v916
    %v1004 = vpack.c.b16 %v923, %v920
    %v1005 = vpack.c.b16 %v924, %v921
    %v1006 = vpack.c.b16 %v925, %v922
    %v1007 = vpack.c.b16 %v929, %v926
    %v1008 = vpack.c.b16 %v930, %v927
    %v1009 = vpack.c.b16 %v931, %v928
    %v1010 = vpack.c.b16 %v935, %v932
    %v1011 = vpack.c.b16 %v936, %v933
    %v1012 = vpack.c.b16 %v937, %v934
    %v1013 = vpack.c.b16 %v941, %v938
    %v1014 = vpack.c.b16 %v942, %v939
    %v1015 = vpack.c.b16 %v943, %v940
    %1088 = vmatprep.subr.bf16.mxu0 %v966
    %1089 = vmatpush1.bf16.msra.mxu0 %v965
    %1090 = vmatprep.subr.bf16.mxu0 %v963
    %1091 = vmatpush1.bf16.msra.mxu0 %v962
    %1092 = vmatprep.subr.bf16.mxu0 %v960
    %1093 = vmatpush1.bf16.msra.mxu0 %v959
    %1094 = vmatprep.subr.bf16.mxu0 %v957
    %1095 = vmatpush1.bf16.msra.mxu0 %v956
    %1096 = vmatprep.subr.bf16.mxu0 %v954
    %1097 = vmatpush1.bf16.msra.mxu0 %v953
    %1098 = vmatprep.subr.bf16.mxu0 %v951
    %1099 = vmatpush1.bf16.msra.mxu0 %v950
    %1100 = vmatprep.subr.bf16.mxu0 %v948
    %1101 = vmatpush1.bf16.msra.mxu0 %v947
    %1102 = vmatprep.subr.bf16.mxu0 %v945
    %1103 = vmatpush1.bf16.msra.mxu0 %v944
    %1104 = vmatprep.subr.bf16.mxu0 %v990
    %1105 = vmatpush2.bf16.msra.mxu0 %v989
    %1106 = vmatprep.subr.bf16.mxu0 %v987
    %1107 = vmatpush2.bf16.msra.mxu0 %v986
    %1108 = vmatprep.subr.bf16.mxu0 %v984
    %1109 = vmatpush2.bf16.msra.mxu0 %v983
    %1110 = vmatprep.subr.bf16.mxu0 %v981
    %1111 = vmatpush2.bf16.msra.mxu0 %v980
    %1112 = vmatprep.subr.bf16.mxu0 %v978
    %1113 = vmatpush2.bf16.msra.mxu0 %v977
    %1114 = vmatprep.subr.bf16.mxu0 %v975
    %1115 = vmatpush2.bf16.msra.mxu0 %v974
    %1116 = vmatprep.subr.bf16.mxu0 %v972
    %1117 = vmatpush2.bf16.msra.mxu0 %v971
    %1118 = vmatprep.subr.bf16.mxu0 %v969
    %1119 = vmatpush2.bf16.msra.mxu0 %v968
    %1120 = vmatprep.mubr.bf16.mxu0 %v212
    %1121 = vmatmul.mubr.bf16.gmra.mxu0 %v211
    %v1122 = vpop.f32.mrf.mxu0
    %v1123 = vadd.f32 0.0, %v1122
    %v1124 = vpop.f32.mrf.mxu0
    %v1125 = vadd.f32 0.0, %v1124
    %v1126 = vpop.f32.mrf.mxu0
    %v1127 = vadd.f32 0.0, %v1126
    %v1128 = vpop.f32.mrf.mxu0
    %v1129 = vadd.f32 0.0, %v1128
    %1130 = vdwg.mxu0
    %1131 = vmatprep.subr.bf16.mxu0 %v1014
    %1132 = vmatpush1.bf16.msra.mxu0 %v1013
    %1133 = vmatprep.subr.bf16.mxu0 %v1011
    %1134 = vmatpush1.bf16.msra.mxu0 %v1010
    %1135 = vmatprep.subr.bf16.mxu0 %v1008
    %1136 = vmatpush1.bf16.msra.mxu0 %v1007
    %1137 = vmatprep.subr.bf16.mxu0 %v1005
    %1138 = vmatpush1.bf16.msra.mxu0 %v1004
    %1139 = vmatprep.subr.bf16.mxu0 %v1002
    %1140 = vmatpush1.bf16.msra.mxu0 %v1001
    %1141 = vmatprep.subr.bf16.mxu0 %v999
    %1142 = vmatpush1.bf16.msra.mxu0 %v998
    %1143 = vmatprep.subr.bf16.mxu0 %v996
    %1144 = vmatpush1.bf16.msra.mxu0 %v995
    %1145 = vmatprep.subr.bf16.mxu0 %v993
    %1146 = vmatpush1.bf16.msra.mxu0 %v992
    %1147 = vmatprep.subr.bf16.mxu0 0
    %1148 = vmatpush2.bf16.msra.mxu0 0
    %1149 = vmatprep.subr.bf16.mxu0 0
    %1150 = vmatpush2.bf16.msra.mxu0 0
    %1151 = vmatprep.subr.bf16.mxu0 0
    %1152 = vmatpush2.bf16.msra.mxu0 0
    %1153 = vmatprep.subr.bf16.mxu0 0
    %1154 = vmatpush2.bf16.msra.mxu0 0
    %1155 = vmatprep.subr.bf16.mxu0 0
    %1156 = vmatpush2.bf16.msra.mxu0 0
    %1157 = vmatprep.subr.bf16.mxu0 0
    %1158 = vmatpush2.bf16.msra.mxu0 0
    %1159 = vmatprep.subr.bf16.mxu0 0
    %1160 = vmatpush2.bf16.msra.mxu0 0
    %1161 = vmatprep.subr.bf16.mxu0 0
    %1162 = vmatpush2.bf16.msra.mxu0 0
    %1163 = vmatprep.mubr.bf16.mxu0 0
    %1164 = vmatmul.mubr.bf16.gmra.mxu0 %v213
    %v1165 = vpop.f32.mrf.mxu0
    %v1166 = vadd.f32 %v1123, %v1165
    %v1167 = vpop.f32.mrf.mxu0
    %v1168 = vadd.f32 %v1125, %v1167
    %v1169 = vpop.f32.mrf.mxu0
    %v1170 = vadd.f32 %v1127, %v1169
    %v1171 = vpop.f32.mrf.mxu0
    %v1172 = vadd.f32 %v1129, %v1171
    %1173 = vdwg.mxu0
    %1174 = vmatprep.subr.bf16.mxu0 0
    %1175 = vmatpush1.bf16.msra.mxu0 %v967
    %1176 = vmatprep.subr.bf16.mxu0 0
    %1177 = vmatpush1.bf16.msra.mxu0 %v964
    %1178 = vmatprep.subr.bf16.mxu0 0
    %1179 = vmatpush1.bf16.msra.mxu0 %v961
    %1180 = vmatprep.subr.bf16.mxu0 0
    %1181 = vmatpush1.bf16.msra.mxu0 %v958
    %1182 = vmatprep.subr.bf16.mxu0 0
    %1183 = vmatpush1.bf16.msra.mxu0 %v955
    %1184 = vmatprep.subr.bf16.mxu0 0
    %1185 = vmatpush1.bf16.msra.mxu0 %v952
    %1186 = vmatprep.subr.bf16.mxu0 0
    %1187 = vmatpush1.bf16.msra.mxu0 %v949
    %1188 = vmatprep.subr.bf16.mxu0 0
    %1189 = vmatpush1.bf16.msra.mxu0 %v946
    %1190 = vmatprep.subr.bf16.mxu0 0
    %1191 = vmatpush2.bf16.msra.mxu0 %v991
    %1192 = vmatprep.subr.bf16.mxu0 0
    %1193 = vmatpush2.bf16.msra.mxu0 %v988
    %1194 = vmatprep.subr.bf16.mxu0 0
    %1195 = vmatpush2.bf16.msra.mxu0 %v985
    %1196 = vmatprep.subr.bf16.mxu0 0
    %1197 = vmatpush2.bf16.msra.mxu0 %v982
    %1198 = vmatprep.subr.bf16.mxu0 0
    %1199 = vmatpush2.bf16.msra.mxu0 %v979
    %1200 = vmatprep.subr.bf16.mxu0 0
    %1201 = vmatpush2.bf16.msra.mxu0 %v976
    %1202 = vmatprep.subr.bf16.mxu0 0
    %1203 = vmatpush2.bf16.msra.mxu0 %v973
    %1204 = vmatprep.subr.bf16.mxu0 0
    %1205 = vmatpush2.bf16.msra.mxu0 %v970
    %1206 = vmatprep.mubr.bf16.mxu0 %v212
    %1207 = vmatmul.mubr.bf16.gmra.mxu0 %v211
    %v1208 = vpop.f32.mrf.mxu0
    %v1209 = vadd.f32 0.0, %v1208
    %v1210 = vpop.f32.mrf.mxu0
    %v1211 = vpop.f32.mrf.mxu0
    %v1212 = vadd.f32 0.0, %v1211
    %v1213 = vpop.f32.mrf.mxu0
    %1214 = vdwg.mxu0
    %1215 = vmatprep.subr.bf16.mxu0 0
    %1216 = vmatpush1.bf16.msra.mxu0 %v1015
    %1217 = vmatprep.subr.bf16.mxu0 0
    %1218 = vmatpush1.bf16.msra.mxu0 %v1012
    %1219 = vmatprep.subr.bf16.mxu0 0
    %1220 = vmatpush1.bf16.msra.mxu0 %v1009
    %1221 = vmatprep.subr.bf16.mxu0 0
    %1222 = vmatpush1.bf16.msra.mxu0 %v1006
    %1223 = vmatprep.subr.bf16.mxu0 0
    %1224 = vmatpush1.bf16.msra.mxu0 %v1003
    %1225 = vmatprep.subr.bf16.mxu0 0
    %1226 = vmatpush1.bf16.msra.mxu0 %v1000
    %1227 = vmatprep.subr.bf16.mxu0 0
    %1228 = vmatpush1.bf16.msra.mxu0 %v997
    %1229 = vmatprep.subr.bf16.mxu0 0
    %1230 = vmatpush1.bf16.msra.mxu0 %v994
    %1231 = vmatprep.subr.bf16.mxu0 0
    %1232 = vmatpush2.bf16.msra.mxu0 0
    %1233 = vmatprep.subr.bf16.mxu0 0
    %1234 = vmatpush2.bf16.msra.mxu0 0
    %1235 = vmatprep.subr.bf16.mxu0 0
    %1236 = vmatpush2.bf16.msra.mxu0 0
    %1237 = vmatprep.subr.bf16.mxu0 0
    %1238 = vmatpush2.bf16.msra.mxu0 0
    %1239 = vmatprep.subr.bf16.mxu0 0
    %1240 = vmatpush2.bf16.msra.mxu0 0
    %1241 = vmatprep.subr.bf16.mxu0 0
    %1242 = vmatpush2.bf16.msra.mxu0 0
    %1243 = vmatprep.subr.bf16.mxu0 0
    %1244 = vmatpush2.bf16.msra.mxu0 0
    %1245 = vmatprep.subr.bf16.mxu0 0
    %1246 = vmatpush2.bf16.msra.mxu0 0
    %1247 = vmatprep.mubr.bf16.mxu0 0
    %1248 = vmatmul.mubr.bf16.gmra.mxu0 %v213
    %v1249 = vpop.f32.mrf.mxu0
    %v1250 = vadd.f32 %v1209, %v1249
    %v1251 = vpop.f32.mrf.mxu0
    %v1252 = vpop.f32.mrf.mxu0
    %v1253 = vadd.f32 %v1212, %v1252
    %v1254 = vpop.f32.mrf.mxu0
    %1255 = vdwg.mxu0
    %v1256 = vadd.f32 %v590, %v1166
    %v1257 = vadd.f32 %v594, %v1170
    %v1258 = vadd.f32 %v600, %v1166
    %v1259 = vadd.f32 %v604, %v1170
    %v1260 = vlaneseq
    %v1261 = vshrl.u32 %v1260, 7
    %v1262 = vsub.s32 0, %v1261
    %v1263 = vrot.slane %v154, %v1262
    %v1264 = vadd.f32 %v1256, %v1263
    %v1265 = vadd.f32 %v1257, %v1263
    %v1266 = vadd.f32 %v1258, %v1263
    %v1267 = vadd.f32 %v1259, %v1263
    %v1268 = vxor.u32 %v1264, 2147483648
    %v1269 = vxor.u32 %v1265, 2147483648
    %v1270 = vxor.u32 %v1266, 2147483648
    %v1271 = vxor.u32 %v1267, 2147483648
    %v1272 = vmul.f32 %v1268, 1.442695
    %v1273 = vpow.pop %v1272
    %v1274 = vmul.f32 %v1269, 1.442695
    %v1275 = vpow.pop %v1274
    %v1276 = vmul.f32 %v1270, 1.442695
    %v1277 = vpow.pop %v1276
    %v1278 = vmul.f32 %v1271, 1.442695
    %v1279 = vpow.pop %v1278
    %v1280 = vadd.f32 %v1273, 1.0
    %v1281 = vadd.f32 %v1275, 1.0
    %v1282 = vadd.f32 %v1277, 1.0
    %v1283 = vadd.f32 %v1279, 1.0
    %v1284 = vrcp.pop %v1280
    %v1285 = vmul.f32 1.0, %v1284
    %v1286 = vrcp.pop %v1281
    %v1287 = vmul.f32 1.0, %v1286
    %v1288 = vrcp.pop %v1282
    %v1289 = vmul.f32 1.0, %v1288
    %v1290 = vrcp.pop %v1283
    %v1291 = vmul.f32 1.0, %v1290
    %v1292 = vadd.f32 %v592, %v1168
    %v1293 = vadd.f32 %v596, %v1172
    %v1294 = vadd.f32 %v602, %v1168
    %v1295 = vadd.f32 %v606, %v1172
    %v1296 = vlaneseq
    %v1297 = vshrl.u32 %v1296, 7
    %v1298 = vsub.s32 0, %v1297
    %v1299 = vrot.slane %v155, %v1298
    %v1300 = vadd.f32 %v1292, %v1299
    %v1301 = vadd.f32 %v1293, %v1299
    %v1302 = vadd.f32 %v1294, %v1299
    %v1303 = vadd.f32 %v1295, %v1299
    %v1304 = vxor.u32 %v1300, 2147483648
    %v1305 = vxor.u32 %v1301, 2147483648
    %v1306 = vxor.u32 %v1302, 2147483648
    %v1307 = vxor.u32 %v1303, 2147483648
    %v1308 = vmul.f32 %v1304, 1.442695
    %v1309 = vpow.pop %v1308
    %v1310 = vmul.f32 %v1305, 1.442695
    %v1311 = vpow.pop %v1310
    %v1312 = vmul.f32 %v1306, 1.442695
    %v1313 = vpow.pop %v1312
    %v1314 = vmul.f32 %v1307, 1.442695
    %v1315 = vpow.pop %v1314
    %v1316 = vadd.f32 %v1309, 1.0
    %v1317 = vadd.f32 %v1311, 1.0
    %v1318 = vadd.f32 %v1313, 1.0
    %v1319 = vadd.f32 %v1315, 1.0
    %v1320 = vrcp.pop %v1316
    %v1321 = vmul.f32 1.0, %v1320
    %v1322 = vrcp.pop %v1317
    %v1323 = vmul.f32 1.0, %v1322
    %v1324 = vrcp.pop %v1318
    %v1325 = vmul.f32 1.0, %v1324
    %v1326 = vrcp.pop %v1319
    %v1327 = vmul.f32 1.0, %v1326
    %v1328 = vmul.f32 %v1321, %v157
    %v1329 = vmul.f32 %v1323, %v158
    %v1330 = vmul.f32 %v1325, %v159
    %v1331 = vmul.f32 %v1327, %v160
    %v1336 = vrot.slane %v1328, 7
    %v1337 = vrot.slane %v1329, 7
    %v1338 = vsel %vm165, %v1336, %v1337
    %v1339 = vrot.slane %v1330, 7
    %v1340 = vsel %vm165, %v1337, %v1339
    %v1341 = vrot.slane %v1331, 7
    %v1342 = vsel %vm165, %v1339, %v1341
    %v1347 = vsel %vm165, 0.0, %v1336
    %v1348 = vmul.f32 %v1347, %v138
    %v1349 = vmul.f32 %v1338, %v139
    %v1350 = vmul.f32 %v1340, %v140
    %v1351 = vmul.f32 %v1342, %v141
    %v1352 = vrot.slane %v1328, 1
    %v1353 = vrot.slane %v1329, 1
    %v1354 = vsel %vm182, %v1352, %v1353
    %v1355 = vrot.slane %v1330, 1
    %v1356 = vsel %vm182, %v1353, %v1355
    %v1357 = vrot.slane %v1331, 1
    %v1358 = vsel %vm182, %v1355, %v1357
    %v1363 = vsel %vm182, %v1357, 0.0
    %v1364 = vmul.f32 %v1354, %v150
    %v1365 = vmul.f32 %v1356, %v151
    %v1366 = vmul.f32 %v1358, %v152
    %v1367 = vmul.f32 %v1363, %v153
    %v1368 = vpack.c.bf16 %v1349, %v1348
    %v1369 = vpack.c.bf16 %v1329, %v1328
    %v1370 = vpack.c.bf16 %v1365, %v1364
    %v1371 = vpack.c.bf16 %v1351, %v1350
    %v1372 = vpack.c.bf16 %v1331, %v1330
    %v1373 = vpack.c.bf16 %v1367, %v1366
    %v1374 = vld [vmem:[#allocation8] sm:$0xf]
    %v1375 = vld [vmem:[#allocation8 + $0x4] sm:$0xf]
    %v1376 = vld [vmem:[#allocation8 + $0x8] sm:$0xf]
    %v1377 = vld [vmem:[#allocation8 + $0xc] sm:$0xf]
    %v1378 = vld [vmem:[#allocation8 + $0x10] sm:$0xf]
    %v1379 = vld [vmem:[#allocation8 + $0x14] sm:$0xf]
    %v1380 = vld [vmem:[#allocation8 + $0x18] sm:$0xf]
    %v1381 = vld [vmem:[#allocation8 + $0x1c] sm:$0xf]
    %v1382 = vld [vmem:[#allocation8 + $0x20] sm:$0xf]
    %v1383 = vld [vmem:[#allocation8 + $0x24] sm:$0xf]
    %v1384 = vld [vmem:[#allocation8 + $0x28] sm:$0xf]
    %v1385 = vld [vmem:[#allocation8 + $0x2c] sm:$0xf]
    %v1386 = vld [vmem:[#allocation8 + $0x30] sm:$0xf]
    %v1387 = vld [vmem:[#allocation8 + $0x34] sm:$0xf]
    %v1388 = vld [vmem:[#allocation8 + $0x38] sm:$0xf]
    %v1389 = vld [vmem:[#allocation8 + $0x3c] sm:$0xf]
    %v1390 = vld [vmem:[#allocation8 + $0x40] sm:$0xf]
    %v1391 = vld [vmem:[#allocation8 + $0x44] sm:$0xf]
    %v1392 = vld [vmem:[#allocation8 + $0x48] sm:$0xf]
    %v1393 = vld [vmem:[#allocation8 + $0x4c] sm:$0xf]
    %v1394 = vld [vmem:[#allocation8 + $0x50] sm:$0xf]
    %v1395 = vld [vmem:[#allocation8 + $0x54] sm:$0xf]
    %v1396 = vld [vmem:[#allocation8 + $0x58] sm:$0xf]
    %v1397 = vld [vmem:[#allocation8 + $0x5c] sm:$0xf]
    %v1398 = vld [vmem:[#allocation8 + $0x60] sm:$0xf]
    %v1399 = vld [vmem:[#allocation8 + $0x64] sm:$0xf]
    %v1400 = vld [vmem:[#allocation8 + $0x68] sm:$0xf]
    %v1401 = vld [vmem:[#allocation8 + $0x6c] sm:$0xf]
    %v1402 = vld [vmem:[#allocation8 + $0x70] sm:$0xf]
    %v1403 = vld [vmem:[#allocation8 + $0x74] sm:$0xf]
    %v1404 = vld [vmem:[#allocation8 + $0x78] sm:$0xf]
    %v1405 = vld [vmem:[#allocation8 + $0x7c] sm:$0xf]
    %v1406 = vld [vmem:[#allocation8 + $0x80] sm:$0xf]
    %v1407 = vld [vmem:[#allocation8 + $0x84] sm:$0xf]
    %v1408 = vld [vmem:[#allocation8 + $0x88] sm:$0xf]
    %v1409 = vld [vmem:[#allocation8 + $0x8c] sm:$0xf]
    %v1410 = vld [vmem:[#allocation8 + $0x90] sm:$0xf]
    %v1411 = vld [vmem:[#allocation8 + $0x94] sm:$0xf]
    %v1412 = vld [vmem:[#allocation8 + $0x98] sm:$0xf]
    %v1413 = vld [vmem:[#allocation8 + $0x9c] sm:$0xf]
    %v1414 = vld [vmem:[#allocation8 + $0xa0] sm:$0xf]
    %v1415 = vld [vmem:[#allocation8 + $0xa4] sm:$0xf]
    %v1416 = vld [vmem:[#allocation8 + $0xa8] sm:$0xf]
    %v1417 = vld [vmem:[#allocation8 + $0xac] sm:$0xf]
    %v1418 = vld [vmem:[#allocation8 + $0xb0] sm:$0xf]
    %v1419 = vld [vmem:[#allocation8 + $0xb4] sm:$0xf]
    %v1420 = vld [vmem:[#allocation8 + $0xb8] sm:$0xf]
    %v1421 = vld [vmem:[#allocation8 + $0xbc] sm:$0xf]
    %v1470 = vunpack.c.l.b16 %v1374
    %v1471 = vunpack.c.l.b16 %v1375
    %v1472 = vunpack.c.l.b16 %v1376
    %v1473 = vunpack.c.l.b16 %v1377
    %v1474 = vunpack.c.l.b16 %v1378
    %v1475 = vunpack.c.l.b16 %v1379
    %v1476 = vunpack.c.l.b16 %v1380
    %v1477 = vunpack.c.l.b16 %v1381
    %v1478 = vunpack.c.l.b16 %v1382
    %v1479 = vunpack.c.l.b16 %v1383
    %v1480 = vunpack.c.l.b16 %v1384
    %v1481 = vunpack.c.l.b16 %v1385
    %v1482 = vunpack.c.l.b16 %v1386
    %v1483 = vunpack.c.l.b16 %v1387
    %v1484 = vunpack.c.l.b16 %v1388
    %v1485 = vunpack.c.l.b16 %v1389
    %v1486 = vunpack.c.l.b16 %v1390
    %v1487 = vunpack.c.l.b16 %v1391
    %v1488 = vunpack.c.l.b16 %v1392
    %v1489 = vunpack.c.l.b16 %v1393
    %v1490 = vunpack.c.l.b16 %v1394
    %v1491 = vunpack.c.l.b16 %v1395
    %v1492 = vunpack.c.l.b16 %v1396
    %v1493 = vunpack.c.l.b16 %v1397
    %v1494 = vunpack.c.l.b16 %v1398
    %v1495 = vunpack.c.l.b16 %v1399
    %v1496 = vunpack.c.l.b16 %v1400
    %v1497 = vunpack.c.l.b16 %v1401
    %v1498 = vunpack.c.l.b16 %v1402
    %v1499 = vunpack.c.l.b16 %v1403
    %v1500 = vunpack.c.l.b16 %v1404
    %v1501 = vunpack.c.l.b16 %v1405
    %v1502 = vunpack.c.l.b16 %v1406
    %v1503 = vunpack.c.l.b16 %v1407
    %v1504 = vunpack.c.l.b16 %v1408
    %v1505 = vunpack.c.l.b16 %v1409
    %v1506 = vunpack.c.l.b16 %v1410
    %v1507 = vunpack.c.l.b16 %v1411
    %v1508 = vunpack.c.l.b16 %v1412
    %v1509 = vunpack.c.l.b16 %v1413
    %v1510 = vunpack.c.l.b16 %v1414
    %v1511 = vunpack.c.l.b16 %v1415
    %v1512 = vunpack.c.l.b16 %v1416
    %v1513 = vunpack.c.l.b16 %v1417
    %v1514 = vunpack.c.l.b16 %v1418
    %v1515 = vunpack.c.l.b16 %v1419
    %v1516 = vunpack.c.l.b16 %v1420
    %v1517 = vunpack.c.l.b16 %v1421
    %v1518 = vpack.c.b16 %v1471, %v1470
    %v1519 = vpack.c.b16 %v1473, %v1472
    %v1520 = vpack.c.b16 %v1475, %v1474
    %v1521 = vpack.c.b16 %v1477, %v1476
    %v1522 = vpack.c.b16 %v1479, %v1478
    %v1523 = vpack.c.b16 %v1481, %v1480
    %v1524 = vpack.c.b16 %v1483, %v1482
    %v1525 = vpack.c.b16 %v1485, %v1484
    %v1526 = vpack.c.b16 %v1487, %v1486
    %v1527 = vpack.c.b16 %v1489, %v1488
    %v1528 = vpack.c.b16 %v1491, %v1490
    %v1529 = vpack.c.b16 %v1493, %v1492
    %v1530 = vpack.c.b16 %v1495, %v1494
    %v1531 = vpack.c.b16 %v1497, %v1496
    %v1532 = vpack.c.b16 %v1499, %v1498
    %v1533 = vpack.c.b16 %v1501, %v1500
    %v1534 = vpack.c.b16 %v1503, %v1502
    %v1535 = vpack.c.b16 %v1505, %v1504
    %v1536 = vpack.c.b16 %v1507, %v1506
    %v1537 = vpack.c.b16 %v1509, %v1508
    %v1538 = vpack.c.b16 %v1511, %v1510
    %v1539 = vpack.c.b16 %v1513, %v1512
    %v1540 = vpack.c.b16 %v1515, %v1514
    %v1541 = vpack.c.b16 %v1517, %v1516
    %1566 = vmatprep.subr.bf16.mxu0 0
    %1567 = vmatpush1.bf16.msra.mxu0 %v1525
    %1568 = vmatprep.subr.bf16.mxu0 0
    %1569 = vmatpush1.bf16.msra.mxu0 %v1524
    %1570 = vmatprep.subr.bf16.mxu0 0
    %1571 = vmatpush1.bf16.msra.mxu0 %v1523
    %1572 = vmatprep.subr.bf16.mxu0 0
    %1573 = vmatpush1.bf16.msra.mxu0 %v1522
    %1574 = vmatprep.subr.bf16.mxu0 0
    %1575 = vmatpush1.bf16.msra.mxu0 %v1521
    %1576 = vmatprep.subr.bf16.mxu0 0
    %1577 = vmatpush1.bf16.msra.mxu0 %v1520
    %1578 = vmatprep.subr.bf16.mxu0 0
    %1579 = vmatpush1.bf16.msra.mxu0 %v1519
    %1580 = vmatprep.subr.bf16.mxu0 0
    %1581 = vmatpush1.bf16.msra.mxu0 %v1518
    %1582 = vmatprep.subr.bf16.mxu0 0
    %1583 = vmatpush2.bf16.msra.mxu0 %v1533
    %1584 = vmatprep.subr.bf16.mxu0 0
    %1585 = vmatpush2.bf16.msra.mxu0 %v1532
    %1586 = vmatprep.subr.bf16.mxu0 0
    %1587 = vmatpush2.bf16.msra.mxu0 %v1531
    %1588 = vmatprep.subr.bf16.mxu0 0
    %1589 = vmatpush2.bf16.msra.mxu0 %v1530
    %1590 = vmatprep.subr.bf16.mxu0 0
    %1591 = vmatpush2.bf16.msra.mxu0 %v1529
    %1592 = vmatprep.subr.bf16.mxu0 0
    %1593 = vmatpush2.bf16.msra.mxu0 %v1528
    %1594 = vmatprep.subr.bf16.mxu0 0
    %1595 = vmatpush2.bf16.msra.mxu0 %v1527
    %1596 = vmatprep.subr.bf16.mxu0 0
    %1597 = vmatpush2.bf16.msra.mxu0 %v1526
    %1598 = vmatprep.mubr.bf16.mxu0 %v1369
    %1599 = vmatmul.mubr.bf16.gmra.mxu0 %v1368
    %v1600 = vpop.f32.mrf.mxu0
    %v1601 = vadd.f32 0.0, %v1600
    %v1602 = vpop.f32.mrf.mxu0
    %v1603 = vpop.f32.mrf.mxu0
    %v1604 = vadd.f32 0.0, %v1603
    %v1605 = vpop.f32.mrf.mxu0
    %1606 = vmatprep.mubr.bf16.mxu0 %v1372
    %1607 = vmatmul.mubr.bf16.gmra.mxu0 %v1371
    %v1608 = vpop.f32.mrf.mxu0
    %v1609 = vadd.f32 0.0, %v1608
    %v1610 = vpop.f32.mrf.mxu0
    %v1611 = vpop.f32.mrf.mxu0
    %v1612 = vadd.f32 0.0, %v1611
    %v1613 = vpop.f32.mrf.mxu0
    %1614 = vdwg.mxu0
    %1615 = vmatprep.subr.bf16.mxu0 0
    %1616 = vmatpush1.bf16.msra.mxu0 %v1541
    %1617 = vmatprep.subr.bf16.mxu0 0
    %1618 = vmatpush1.bf16.msra.mxu0 %v1540
    %1619 = vmatprep.subr.bf16.mxu0 0
    %1620 = vmatpush1.bf16.msra.mxu0 %v1539
    %1621 = vmatprep.subr.bf16.mxu0 0
    %1622 = vmatpush1.bf16.msra.mxu0 %v1538
    %1623 = vmatprep.subr.bf16.mxu0 0
    %1624 = vmatpush1.bf16.msra.mxu0 %v1537
    %1625 = vmatprep.subr.bf16.mxu0 0
    %1626 = vmatpush1.bf16.msra.mxu0 %v1536
    %1627 = vmatprep.subr.bf16.mxu0 0
    %1628 = vmatpush1.bf16.msra.mxu0 %v1535
    %1629 = vmatprep.subr.bf16.mxu0 0
    %1630 = vmatpush1.bf16.msra.mxu0 %v1534
    %1631 = vmatprep.subr.bf16.mxu0 0
    %1632 = vmatpush2.bf16.msra.mxu0 0
    %1633 = vmatprep.subr.bf16.mxu0 0
    %1634 = vmatpush2.bf16.msra.mxu0 0
    %1635 = vmatprep.subr.bf16.mxu0 0
    %1636 = vmatpush2.bf16.msra.mxu0 0
    %1637 = vmatprep.subr.bf16.mxu0 0
    %1638 = vmatpush2.bf16.msra.mxu0 0
    %1639 = vmatprep.subr.bf16.mxu0 0
    %1640 = vmatpush2.bf16.msra.mxu0 0
    %1641 = vmatprep.subr.bf16.mxu0 0
    %1642 = vmatpush2.bf16.msra.mxu0 0
    %1643 = vmatprep.subr.bf16.mxu0 0
    %1644 = vmatpush2.bf16.msra.mxu0 0
    %1645 = vmatprep.subr.bf16.mxu0 0
    %1646 = vmatpush2.bf16.msra.mxu0 0
    %1647 = vmatprep.mubr.bf16.mxu0 0
    %1648 = vmatmul.mubr.bf16.gmra.mxu0 %v1370
    %v1649 = vpop.f32.mrf.mxu0
    %v1650 = vadd.f32 %v1601, %v1649
    %v1651 = vpop.f32.mrf.mxu0
    %v1652 = vpop.f32.mrf.mxu0
    %v1653 = vadd.f32 %v1604, %v1652
    %v1654 = vpop.f32.mrf.mxu0
    %1655 = vmatprep.mubr.bf16.mxu0 0
    %1656 = vmatmul.mubr.bf16.gmra.mxu0 %v1373
    %v1657 = vpop.f32.mrf.mxu0
    %v1658 = vadd.f32 %v1609, %v1657
    %v1659 = vpop.f32.mrf.mxu0
    %v1660 = vpop.f32.mrf.mxu0
    %v1661 = vadd.f32 %v1612, %v1660
    %v1662 = vpop.f32.mrf.mxu0
    %1663 = vdwg.mxu0
    %v1664 = vadd.f32 %v1650, %v1250
    %v1665 = vadd.f32 %v1653, %v1253
    %v1666 = vadd.f32 %v1658, %v1250
    %v1667 = vadd.f32 %v1661, %v1253
    %v1668 = vlaneseq
    %v1669 = vshrl.u32 %v1668, 7
    %v1670 = vsub.s32 0, %v1669
    %v1671 = vrot.slane %v156, %v1670
    %v1672 = vadd.f32 %v1664, %v1671
    %v1673 = vadd.f32 %v1665, %v1671
    %v1674 = vadd.f32 %v1666, %v1671
    %v1675 = vadd.f32 %v1667, %v1671
    %v1676 = vtanh.pop %v1672
    %v1677 = vtanh.pop %v1673
    %v1678 = vtanh.pop %v1674
    %v1679 = vtanh.pop %v1675
    %v1680 = vsub.f32 1.0, %v1285
    %v1681 = vsub.f32 1.0, %v1287
    %v1682 = vsub.f32 1.0, %v1289
    %v1683 = vsub.f32 1.0, %v1291
    %v1684 = vmul.f32 %v1680, %v157
    %v1685 = vmul.f32 %v1681, %v158
    %v1686 = vmul.f32 %v1682, %v159
    %v1687 = vmul.f32 %v1683, %v160
    %v1688 = vmul.f32 %v1285, %v1676
    %v1689 = vmul.f32 %v1287, %v1677
    %v1690 = vmul.f32 %v1289, %v1678
    %v1691 = vmul.f32 %v1291, %v1679
    %v1692 = vadd.f32 %v1684, %v1688
    %v1693 = vadd.f32 %v1685, %v1689
    %v1694 = vadd.f32 %v1686, %v1690
    %v1695 = vadd.f32 %v1687, %v1691
    %v1700 = vrot.slane %v1692, 7
    %v1701 = vrot.slane %v1693, 7
    %v1702 = vsel %vm165, %v1700, %v1701
    %v1703 = vrot.slane %v1694, 7
    %v1704 = vsel %vm165, %v1701, %v1703
    %v1705 = vrot.slane %v1695, 7
    %v1706 = vsel %vm165, %v1703, %v1705
    %v1711 = vsel %vm165, 0.0, %v1700
    %v1712 = vmul.f32 %v1711, %v138
    %v1713 = vmul.f32 %v1702, %v139
    %v1714 = vmul.f32 %v1704, %v140
    %v1715 = vmul.f32 %v1706, %v141
    %v1716 = vrot.slane %v1692, 1
    %v1717 = vrot.slane %v1693, 1
    %v1718 = vsel %vm182, %v1716, %v1717
    %v1719 = vrot.slane %v1694, 1
    %v1720 = vsel %vm182, %v1717, %v1719
    %v1721 = vrot.slane %v1695, 1
    %v1722 = vsel %vm182, %v1719, %v1721
    %v1727 = vsel %vm182, %v1721, 0.0
    %v1728 = vmul.f32 %v1718, %v150
    %v1729 = vmul.f32 %v1720, %v151
    %v1730 = vmul.f32 %v1722, %v152
    %v1731 = vmul.f32 %v1727, %v153
    %v1732 = vpack.c.bf16 %v1713, %v1712
    %v1733 = vpack.c.bf16 %v1693, %v1692
    %v1734 = vpack.c.bf16 %v1729, %v1728
    %v1735 = vpack.c.bf16 %v1715, %v1714
    %v1736 = vpack.c.bf16 %v1695, %v1694
    %v1737 = vpack.c.bf16 %v1731, %v1730
    %v1738 = vadd.f32 %v1712, %v1714
    %v1739 = vadd.f32 %v1692, %v1694
    %v1740 = vadd.f32 %v1728, %v1730
    %v1741 = vadd.f32 %v1713, %v1715
    %v1742 = vadd.f32 %v1693, %v1695
    %v1743 = vadd.f32 %v1729, %v1731
    %v1744 = vpack.c.bf16 %v1741, %v1738
    %v1745 = vpack.c.bf16 %v1742, %v1739
    %v1746 = vpack.c.bf16 %v1743, %v1740
    %1747 = vmatprep.subr.bf16.mxu0 %v421
    %1748 = vmatpush1.bf16.msra.mxu0 %v420
    %1749 = vmatprep.subr.bf16.mxu0 %v419
    %1750 = vmatpush1.bf16.msra.mxu0 %v418
    %1751 = vmatprep.subr.bf16.mxu0 %v417
    %1752 = vmatpush1.bf16.msra.mxu0 %v416
    %1753 = vmatprep.subr.bf16.mxu0 %v415
    %1754 = vmatpush1.bf16.msra.mxu0 %v414
    %1755 = vmatprep.subr.bf16.mxu0 %v413
    %1756 = vmatpush1.bf16.msra.mxu0 %v412
    %1757 = vmatprep.subr.bf16.mxu0 %v411
    %1758 = vmatpush1.bf16.msra.mxu0 %v410
    %1759 = vmatprep.subr.bf16.mxu0 %v409
    %1760 = vmatpush1.bf16.msra.mxu0 %v408
    %1761 = vmatprep.subr.bf16.mxu0 %v407
    %1762 = vmatpush1.bf16.msra.mxu0 %v406
    %1763 = vmatprep.subr.bf16.mxu0 %v437
    %1764 = vmatpush2.bf16.msra.mxu0 %v436
    %1765 = vmatprep.subr.bf16.mxu0 %v435
    %1766 = vmatpush2.bf16.msra.mxu0 %v434
    %1767 = vmatprep.subr.bf16.mxu0 %v433
    %1768 = vmatpush2.bf16.msra.mxu0 %v432
    %1769 = vmatprep.subr.bf16.mxu0 %v431
    %1770 = vmatpush2.bf16.msra.mxu0 %v430
    %1771 = vmatprep.subr.bf16.mxu0 %v429
    %1772 = vmatpush2.bf16.msra.mxu0 %v428
    %1773 = vmatprep.subr.bf16.mxu0 %v427
    %1774 = vmatpush2.bf16.msra.mxu0 %v426
    %1775 = vmatprep.subr.bf16.mxu0 %v425
    %1776 = vmatpush2.bf16.msra.mxu0 %v424
    %1777 = vmatprep.subr.bf16.mxu0 %v423
    %1778 = vmatpush2.bf16.msra.mxu0 %v422
    %1779 = vmatprep.mubr.bf16.mxu0 %v1733
    %1780 = vmatmul.mubr.bf16.gmra.mxu0 %v1732
    %v1781 = vpop.f32.mrf.mxu0
    %v1782 = vadd.f32 0.0, %v1781
    %v1783 = vpop.f32.mrf.mxu0
    %v1784 = vadd.f32 0.0, %v1783
    %v1785 = vpop.f32.mrf.mxu0
    %v1786 = vadd.f32 0.0, %v1785
    %v1787 = vpop.f32.mrf.mxu0
    %v1788 = vadd.f32 0.0, %v1787
    %1789 = vmatprep.mubr.bf16.mxu0 %v1736
    %1790 = vmatmul.mubr.bf16.gmra.mxu0 %v1735
    %v1791 = vpop.f32.mrf.mxu0
    %v1792 = vadd.f32 0.0, %v1791
    %v1793 = vpop.f32.mrf.mxu0
    %v1794 = vadd.f32 0.0, %v1793
    %v1795 = vpop.f32.mrf.mxu0
    %v1796 = vadd.f32 0.0, %v1795
    %v1797 = vpop.f32.mrf.mxu0
    %v1798 = vadd.f32 0.0, %v1797
    %1799 = vdwg.mxu0
    %1800 = vmatprep.subr.bf16.mxu0 %v453
    %1801 = vmatpush1.bf16.msra.mxu0 %v452
    %1802 = vmatprep.subr.bf16.mxu0 %v451
    %1803 = vmatpush1.bf16.msra.mxu0 %v450
    %1804 = vmatprep.subr.bf16.mxu0 %v449
    %1805 = vmatpush1.bf16.msra.mxu0 %v448
    %1806 = vmatprep.subr.bf16.mxu0 %v447
    %1807 = vmatpush1.bf16.msra.mxu0 %v446
    %1808 = vmatprep.subr.bf16.mxu0 %v445
    %1809 = vmatpush1.bf16.msra.mxu0 %v444
    %1810 = vmatprep.subr.bf16.mxu0 %v443
    %1811 = vmatpush1.bf16.msra.mxu0 %v442
    %1812 = vmatprep.subr.bf16.mxu0 %v441
    %1813 = vmatpush1.bf16.msra.mxu0 %v440
    %1814 = vmatprep.subr.bf16.mxu0 %v439
    %1815 = vmatpush1.bf16.msra.mxu0 %v438
    %1816 = vmatprep.subr.bf16.mxu0 0
    %1817 = vmatpush2.bf16.msra.mxu0 0
    %1818 = vmatprep.subr.bf16.mxu0 0
    %1819 = vmatpush2.bf16.msra.mxu0 0
    %1820 = vmatprep.subr.bf16.mxu0 0
    %1821 = vmatpush2.bf16.msra.mxu0 0
    %1822 = vmatprep.subr.bf16.mxu0 0
    %1823 = vmatpush2.bf16.msra.mxu0 0
    %1824 = vmatprep.subr.bf16.mxu0 0
    %1825 = vmatpush2.bf16.msra.mxu0 0
    %1826 = vmatprep.subr.bf16.mxu0 0
    %1827 = vmatpush2.bf16.msra.mxu0 0
    %1828 = vmatprep.subr.bf16.mxu0 0
    %1829 = vmatpush2.bf16.msra.mxu0 0
    %1830 = vmatprep.subr.bf16.mxu0 0
    %1831 = vmatpush2.bf16.msra.mxu0 0
    %1832 = vmatprep.mubr.bf16.mxu0 0
    %1833 = vmatmul.mubr.bf16.gmra.mxu0 %v1734
    %v1834 = vpop.f32.mrf.mxu0
    %v1835 = vadd.f32 %v1782, %v1834
    %v1836 = vpop.f32.mrf.mxu0
    %v1837 = vadd.f32 %v1784, %v1836
    %v1838 = vpop.f32.mrf.mxu0
    %v1839 = vadd.f32 %v1786, %v1838
    %v1840 = vpop.f32.mrf.mxu0
    %v1841 = vadd.f32 %v1788, %v1840
    %1842 = vmatprep.mubr.bf16.mxu0 0
    %1843 = vmatmul.mubr.bf16.gmra.mxu0 %v1737
    %v1844 = vpop.f32.mrf.mxu0
    %v1845 = vadd.f32 %v1792, %v1844
    %v1846 = vpop.f32.mrf.mxu0
    %v1847 = vadd.f32 %v1794, %v1846
    %v1848 = vpop.f32.mrf.mxu0
    %v1849 = vadd.f32 %v1796, %v1848
    %v1850 = vpop.f32.mrf.mxu0
    %v1851 = vadd.f32 %v1798, %v1850
    %1852 = vdwg.mxu0
    %1853 = vmatprep.subr.bf16.mxu0 %v966
    %1854 = vmatpush1.bf16.msra.mxu0 %v965
    %1855 = vmatprep.subr.bf16.mxu0 %v963
    %1856 = vmatpush1.bf16.msra.mxu0 %v962
    %1857 = vmatprep.subr.bf16.mxu0 %v960
    %1858 = vmatpush1.bf16.msra.mxu0 %v959
    %1859 = vmatprep.subr.bf16.mxu0 %v957
    %1860 = vmatpush1.bf16.msra.mxu0 %v956
    %1861 = vmatprep.subr.bf16.mxu0 %v954
    %1862 = vmatpush1.bf16.msra.mxu0 %v953
    %1863 = vmatprep.subr.bf16.mxu0 %v951
    %1864 = vmatpush1.bf16.msra.mxu0 %v950
    %1865 = vmatprep.subr.bf16.mxu0 %v948
    %1866 = vmatpush1.bf16.msra.mxu0 %v947
    %1867 = vmatprep.subr.bf16.mxu0 %v945
    %1868 = vmatpush1.bf16.msra.mxu0 %v944
    %1869 = vmatprep.subr.bf16.mxu0 %v990
    %1870 = vmatpush2.bf16.msra.mxu0 %v989
    %1871 = vmatprep.subr.bf16.mxu0 %v987
    %1872 = vmatpush2.bf16.msra.mxu0 %v986
    %1873 = vmatprep.subr.bf16.mxu0 %v984
    %1874 = vmatpush2.bf16.msra.mxu0 %v983
    %1875 = vmatprep.subr.bf16.mxu0 %v981
    %1876 = vmatpush2.bf16.msra.mxu0 %v980
    %1877 = vmatprep.subr.bf16.mxu0 %v978
    %1878 = vmatpush2.bf16.msra.mxu0 %v977
    %1879 = vmatprep.subr.bf16.mxu0 %v975
    %1880 = vmatpush2.bf16.msra.mxu0 %v974
    %1881 = vmatprep.subr.bf16.mxu0 %v972
    %1882 = vmatpush2.bf16.msra.mxu0 %v971
    %1883 = vmatprep.subr.bf16.mxu0 %v969
    %1884 = vmatpush2.bf16.msra.mxu0 %v968
    %1885 = vmatprep.mubr.bf16.mxu0 %v1745
    %1886 = vmatmul.mubr.bf16.gmra.mxu0 %v1744
    %v1887 = vpop.f32.mrf.mxu0
    %v1888 = vadd.f32 0.0, %v1887
    %v1889 = vpop.f32.mrf.mxu0
    %v1890 = vadd.f32 0.0, %v1889
    %v1891 = vpop.f32.mrf.mxu0
    %v1892 = vadd.f32 0.0, %v1891
    %v1893 = vpop.f32.mrf.mxu0
    %v1894 = vadd.f32 0.0, %v1893
    %1895 = vdwg.mxu0
    %1896 = vmatprep.subr.bf16.mxu0 %v1014
    %1897 = vmatpush1.bf16.msra.mxu0 %v1013
    %1898 = vmatprep.subr.bf16.mxu0 %v1011
    %1899 = vmatpush1.bf16.msra.mxu0 %v1010
    %1900 = vmatprep.subr.bf16.mxu0 %v1008
    %1901 = vmatpush1.bf16.msra.mxu0 %v1007
    %1902 = vmatprep.subr.bf16.mxu0 %v1005
    %1903 = vmatpush1.bf16.msra.mxu0 %v1004
    %1904 = vmatprep.subr.bf16.mxu0 %v1002
    %1905 = vmatpush1.bf16.msra.mxu0 %v1001
    %1906 = vmatprep.subr.bf16.mxu0 %v999
    %1907 = vmatpush1.bf16.msra.mxu0 %v998
    %1908 = vmatprep.subr.bf16.mxu0 %v996
    %1909 = vmatpush1.bf16.msra.mxu0 %v995
    %1910 = vmatprep.subr.bf16.mxu0 %v993
    %1911 = vmatpush1.bf16.msra.mxu0 %v992
    %1912 = vmatprep.subr.bf16.mxu0 0
    %1913 = vmatpush2.bf16.msra.mxu0 0
    %1914 = vmatprep.subr.bf16.mxu0 0
    %1915 = vmatpush2.bf16.msra.mxu0 0
    %1916 = vmatprep.subr.bf16.mxu0 0
    %1917 = vmatpush2.bf16.msra.mxu0 0
    %1918 = vmatprep.subr.bf16.mxu0 0
    %1919 = vmatpush2.bf16.msra.mxu0 0
    %1920 = vmatprep.subr.bf16.mxu0 0
    %1921 = vmatpush2.bf16.msra.mxu0 0
    %1922 = vmatprep.subr.bf16.mxu0 0
    %1923 = vmatpush2.bf16.msra.mxu0 0
    %1924 = vmatprep.subr.bf16.mxu0 0
    %1925 = vmatpush2.bf16.msra.mxu0 0
    %1926 = vmatprep.subr.bf16.mxu0 0
    %1927 = vmatpush2.bf16.msra.mxu0 0
    %1928 = vmatprep.mubr.bf16.mxu0 0
    %1929 = vmatmul.mubr.bf16.gmra.mxu0 %v1746
    %v1930 = vpop.f32.mrf.mxu0
    %v1931 = vadd.f32 %v1888, %v1930
    %v1932 = vpop.f32.mrf.mxu0
    %v1933 = vadd.f32 %v1890, %v1932
    %v1934 = vpop.f32.mrf.mxu0
    %v1935 = vadd.f32 %v1892, %v1934
    %v1936 = vpop.f32.mrf.mxu0
    %v1937 = vadd.f32 %v1894, %v1936
    %1938 = vdwg.mxu0
    %1939 = vmatprep.subr.bf16.mxu0 0
    %1940 = vmatpush1.bf16.msra.mxu0 %v967
    %1941 = vmatprep.subr.bf16.mxu0 0
    %1942 = vmatpush1.bf16.msra.mxu0 %v964
    %1943 = vmatprep.subr.bf16.mxu0 0
    %1944 = vmatpush1.bf16.msra.mxu0 %v961
    %1945 = vmatprep.subr.bf16.mxu0 0
    %1946 = vmatpush1.bf16.msra.mxu0 %v958
    %1947 = vmatprep.subr.bf16.mxu0 0
    %1948 = vmatpush1.bf16.msra.mxu0 %v955
    %1949 = vmatprep.subr.bf16.mxu0 0
    %1950 = vmatpush1.bf16.msra.mxu0 %v952
    %1951 = vmatprep.subr.bf16.mxu0 0
    %1952 = vmatpush1.bf16.msra.mxu0 %v949
    %1953 = vmatprep.subr.bf16.mxu0 0
    %1954 = vmatpush1.bf16.msra.mxu0 %v946
    %1955 = vmatprep.subr.bf16.mxu0 0
    %1956 = vmatpush2.bf16.msra.mxu0 %v991
    %1957 = vmatprep.subr.bf16.mxu0 0
    %1958 = vmatpush2.bf16.msra.mxu0 %v988
    %1959 = vmatprep.subr.bf16.mxu0 0
    %1960 = vmatpush2.bf16.msra.mxu0 %v985
    %1961 = vmatprep.subr.bf16.mxu0 0
    %1962 = vmatpush2.bf16.msra.mxu0 %v982
    %1963 = vmatprep.subr.bf16.mxu0 0
    %1964 = vmatpush2.bf16.msra.mxu0 %v979
    %1965 = vmatprep.subr.bf16.mxu0 0
    %1966 = vmatpush2.bf16.msra.mxu0 %v976
    %1967 = vmatprep.subr.bf16.mxu0 0
    %1968 = vmatpush2.bf16.msra.mxu0 %v973
    %1969 = vmatprep.subr.bf16.mxu0 0
    %1970 = vmatpush2.bf16.msra.mxu0 %v970
    %1971 = vmatprep.mubr.bf16.mxu0 %v1745
    %1972 = vmatmul.mubr.bf16.gmra.mxu0 %v1744
    %v1973 = vpop.f32.mrf.mxu0
    %v1974 = vadd.f32 0.0, %v1973
    %v1975 = vpop.f32.mrf.mxu0
    %v1976 = vpop.f32.mrf.mxu0
    %v1977 = vadd.f32 0.0, %v1976
    %v1978 = vpop.f32.mrf.mxu0
    %1979 = vdwg.mxu0
    %1980 = vmatprep.subr.bf16.mxu0 0
    %1981 = vmatpush1.bf16.msra.mxu0 %v1015
    %1982 = vmatprep.subr.bf16.mxu0 0
    %1983 = vmatpush1.bf16.msra.mxu0 %v1012
    %1984 = vmatprep.subr.bf16.mxu0 0
    %1985 = vmatpush1.bf16.msra.mxu0 %v1009
    %1986 = vmatprep.subr.bf16.mxu0 0
    %1987 = vmatpush1.bf16.msra.mxu0 %v1006
    %1988 = vmatprep.subr.bf16.mxu0 0
    %1989 = vmatpush1.bf16.msra.mxu0 %v1003
    %1990 = vmatprep.subr.bf16.mxu0 0
    %1991 = vmatpush1.bf16.msra.mxu0 %v1000
    %1992 = vmatprep.subr.bf16.mxu0 0
    %1993 = vmatpush1.bf16.msra.mxu0 %v997
    %1994 = vmatprep.subr.bf16.mxu0 0
    %1995 = vmatpush1.bf16.msra.mxu0 %v994
    %1996 = vmatprep.subr.bf16.mxu0 0
    %1997 = vmatpush2.bf16.msra.mxu0 0
    %1998 = vmatprep.subr.bf16.mxu0 0
    %1999 = vmatpush2.bf16.msra.mxu0 0
    %2000 = vmatprep.subr.bf16.mxu0 0
    %2001 = vmatpush2.bf16.msra.mxu0 0
    %2002 = vmatprep.subr.bf16.mxu0 0
    %2003 = vmatpush2.bf16.msra.mxu0 0
    %2004 = vmatprep.subr.bf16.mxu0 0
    %2005 = vmatpush2.bf16.msra.mxu0 0
    %2006 = vmatprep.subr.bf16.mxu0 0
    %2007 = vmatpush2.bf16.msra.mxu0 0
    %2008 = vmatprep.subr.bf16.mxu0 0
    %2009 = vmatpush2.bf16.msra.mxu0 0
    %2010 = vmatprep.subr.bf16.mxu0 0
    %2011 = vmatpush2.bf16.msra.mxu0 0
    %2012 = vmatprep.mubr.bf16.mxu0 0
    %2013 = vmatmul.mubr.bf16.gmra.mxu0 %v1746
    %v2014 = vpop.f32.mrf.mxu0
    %v2015 = vadd.f32 %v1974, %v2014
    %v2016 = vpop.f32.mrf.mxu0
    %v2017 = vpop.f32.mrf.mxu0
    %v2018 = vadd.f32 %v1977, %v2017
    %v2019 = vpop.f32.mrf.mxu0
    %2020 = vdwg.mxu0
    %v2021 = vadd.f32 %v1835, %v1931
    %v2022 = vadd.f32 %v1839, %v1935
    %v2023 = vadd.f32 %v1845, %v1931
    %v2024 = vadd.f32 %v1849, %v1935
    %v2025 = vadd.f32 %v2021, %v1263
    %v2026 = vadd.f32 %v2022, %v1263
    %v2027 = vadd.f32 %v2023, %v1263
    %v2028 = vadd.f32 %v2024, %v1263
    %v2029 = vxor.u32 %v2025, 2147483648
    %v2030 = vxor.u32 %v2026, 2147483648
    %v2031 = vxor.u32 %v2027, 2147483648
    %v2032 = vxor.u32 %v2028, 2147483648
    %v2033 = vmul.f32 %v2029, 1.442695
    %v2034 = vpow.pop %v2033
    %v2035 = vmul.f32 %v2030, 1.442695
    %v2036 = vpow.pop %v2035
    %v2037 = vmul.f32 %v2031, 1.442695
    %v2038 = vpow.pop %v2037
    %v2039 = vmul.f32 %v2032, 1.442695
    %v2040 = vpow.pop %v2039
    %v2041 = vadd.f32 %v2034, 1.0
    %v2042 = vadd.f32 %v2036, 1.0
    %v2043 = vadd.f32 %v2038, 1.0
    %v2044 = vadd.f32 %v2040, 1.0
    %v2045 = vrcp.pop %v2041
    %v2046 = vmul.f32 1.0, %v2045
    %v2047 = vrcp.pop %v2042
    %v2048 = vmul.f32 1.0, %v2047
    %v2049 = vrcp.pop %v2043
    %v2050 = vmul.f32 1.0, %v2049
    %v2051 = vrcp.pop %v2044
    %v2052 = vmul.f32 1.0, %v2051
    %v2053 = vadd.f32 %v1837, %v1933
    %v2054 = vadd.f32 %v1841, %v1937
    %v2055 = vadd.f32 %v1847, %v1933
    %v2056 = vadd.f32 %v1851, %v1937
    %v2057 = vadd.f32 %v2053, %v1299
    %v2058 = vadd.f32 %v2054, %v1299
    %v2059 = vadd.f32 %v2055, %v1299
    %v2060 = vadd.f32 %v2056, %v1299
    %v2061 = vxor.u32 %v2057, 2147483648
    %v2062 = vxor.u32 %v2058, 2147483648
    %v2063 = vxor.u32 %v2059, 2147483648
    %v2064 = vxor.u32 %v2060, 2147483648
    %v2065 = vmul.f32 %v2061, 1.442695
    %v2066 = vpow.pop %v2065
    %v2067 = vmul.f32 %v2062, 1.442695
    %v2068 = vpow.pop %v2067
    %v2069 = vmul.f32 %v2063, 1.442695
    %v2070 = vpow.pop %v2069
    %v2071 = vmul.f32 %v2064, 1.442695
    %v2072 = vpow.pop %v2071
    %v2073 = vadd.f32 %v2066, 1.0
    %v2074 = vadd.f32 %v2068, 1.0
    %v2075 = vadd.f32 %v2070, 1.0
    %v2076 = vadd.f32 %v2072, 1.0
    %v2077 = vrcp.pop %v2073
    %v2078 = vmul.f32 1.0, %v2077
    %v2079 = vrcp.pop %v2074
    %v2080 = vmul.f32 1.0, %v2079
    %v2081 = vrcp.pop %v2075
    %v2082 = vmul.f32 1.0, %v2081
    %v2083 = vrcp.pop %v2076
    %v2084 = vmul.f32 1.0, %v2083
    %v2085 = vmul.f32 %v2078, %v1692
    %v2086 = vmul.f32 %v2080, %v1693
    %v2087 = vmul.f32 %v2082, %v1694
    %v2088 = vmul.f32 %v2084, %v1695
    %v2093 = vrot.slane %v2085, 7
    %v2094 = vrot.slane %v2086, 7
    %v2095 = vsel %vm165, %v2093, %v2094
    %v2096 = vrot.slane %v2087, 7
    %v2097 = vsel %vm165, %v2094, %v2096
    %v2098 = vrot.slane %v2088, 7
    %v2099 = vsel %vm165, %v2096, %v2098
    %v2104 = vsel %vm165, 0.0, %v2093
    %v2105 = vmul.f32 %v2104, %v138
    %v2106 = vmul.f32 %v2095, %v139
    %v2107 = vmul.f32 %v2097, %v140
    %v2108 = vmul.f32 %v2099, %v141
    %v2109 = vrot.slane %v2085, 1
    %v2110 = vrot.slane %v2086, 1
    %v2111 = vsel %vm182, %v2109, %v2110
    %v2112 = vrot.slane %v2087, 1
    %v2113 = vsel %vm182, %v2110, %v2112
    %v2114 = vrot.slane %v2088, 1
    %v2115 = vsel %vm182, %v2112, %v2114
    %v2120 = vsel %vm182, %v2114, 0.0
    %v2121 = vmul.f32 %v2111, %v150
    %v2122 = vmul.f32 %v2113, %v151
    %v2123 = vmul.f32 %v2115, %v152
    %v2124 = vmul.f32 %v2120, %v153
    %v2125 = vpack.c.bf16 %v2106, %v2105
    %v2126 = vpack.c.bf16 %v2086, %v2085
    %v2127 = vpack.c.bf16 %v2122, %v2121
    %v2128 = vpack.c.bf16 %v2108, %v2107
    %v2129 = vpack.c.bf16 %v2088, %v2087
    %v2130 = vpack.c.bf16 %v2124, %v2123
    %2131 = vmatprep.subr.bf16.mxu0 0
    %2132 = vmatpush1.bf16.msra.mxu0 %v1525
    %2133 = vmatprep.subr.bf16.mxu0 0
    %2134 = vmatpush1.bf16.msra.mxu0 %v1524
    %2135 = vmatprep.subr.bf16.mxu0 0
    %2136 = vmatpush1.bf16.msra.mxu0 %v1523
    %2137 = vmatprep.subr.bf16.mxu0 0
    %2138 = vmatpush1.bf16.msra.mxu0 %v1522
    %2139 = vmatprep.subr.bf16.mxu0 0
    %2140 = vmatpush1.bf16.msra.mxu0 %v1521
    %2141 = vmatprep.subr.bf16.mxu0 0
    %2142 = vmatpush1.bf16.msra.mxu0 %v1520
    %2143 = vmatprep.subr.bf16.mxu0 0
    %2144 = vmatpush1.bf16.msra.mxu0 %v1519
    %2145 = vmatprep.subr.bf16.mxu0 0
    %2146 = vmatpush1.bf16.msra.mxu0 %v1518
    %2147 = vmatprep.subr.bf16.mxu0 0
    %2148 = vmatpush2.bf16.msra.mxu0 %v1533
    %2149 = vmatprep.subr.bf16.mxu0 0
    %2150 = vmatpush2.bf16.msra.mxu0 %v1532
    %2151 = vmatprep.subr.bf16.mxu0 0
    %2152 = vmatpush2.bf16.msra.mxu0 %v1531
    %2153 = vmatprep.subr.bf16.mxu0 0
    %2154 = vmatpush2.bf16.msra.mxu0 %v1530
    %2155 = vmatprep.subr.bf16.mxu0 0
    %2156 = vmatpush2.bf16.msra.mxu0 %v1529
    %2157 = vmatprep.subr.bf16.mxu0 0
    %2158 = vmatpush2.bf16.msra.mxu0 %v1528
    %2159 = vmatprep.subr.bf16.mxu0 0
    %2160 = vmatpush2.bf16.msra.mxu0 %v1527
    %2161 = vmatprep.subr.bf16.mxu0 0
    %2162 = vmatpush2.bf16.msra.mxu0 %v1526
    %2163 = vmatprep.mubr.bf16.mxu0 %v2126
    %2164 = vmatmul.mubr.bf16.gmra.mxu0 %v2125
    %v2165 = vpop.f32.mrf.mxu0
    %v2166 = vadd.f32 0.0, %v2165
    %v2167 = vpop.f32.mrf.mxu0
    %v2168 = vpop.f32.mrf.mxu0
    %v2169 = vadd.f32 0.0, %v2168
    %v2170 = vpop.f32.mrf.mxu0
    %2171 = vmatprep.mubr.bf16.mxu0 %v2129
    %2172 = vmatmul.mubr.bf16.gmra.mxu0 %v2128
    %v2173 = vpop.f32.mrf.mxu0
    %v2174 = vadd.f32 0.0, %v2173
    %v2175 = vpop.f32.mrf.mxu0
    %v2176 = vpop.f32.mrf.mxu0
    %v2177 = vadd.f32 0.0, %v2176
    %v2178 = vpop.f32.mrf.mxu0
    %2179 = vdwg.mxu0
    %2180 = vmatprep.subr.bf16.mxu0 0
    %2181 = vmatpush1.bf16.msra.mxu0 %v1541
    %2182 = vmatprep.subr.bf16.mxu0 0
    %2183 = vmatpush1.bf16.msra.mxu0 %v1540
    %2184 = vmatprep.subr.bf16.mxu0 0
    %2185 = vmatpush1.bf16.msra.mxu0 %v1539
    %2186 = vmatprep.subr.bf16.mxu0 0
    %2187 = vmatpush1.bf16.msra.mxu0 %v1538
    %2188 = vmatprep.subr.bf16.mxu0 0
    %2189 = vmatpush1.bf16.msra.mxu0 %v1537
    %2190 = vmatprep.subr.bf16.mxu0 0
    %2191 = vmatpush1.bf16.msra.mxu0 %v1536
    %2192 = vmatprep.subr.bf16.mxu0 0
    %2193 = vmatpush1.bf16.msra.mxu0 %v1535
    %2194 = vmatprep.subr.bf16.mxu0 0
    %2195 = vmatpush1.bf16.msra.mxu0 %v1534
    %2196 = vmatprep.subr.bf16.mxu0 0
    %2197 = vmatpush2.bf16.msra.mxu0 0
    %2198 = vmatprep.subr.bf16.mxu0 0
    %2199 = vmatpush2.bf16.msra.mxu0 0
    %2200 = vmatprep.subr.bf16.mxu0 0
    %2201 = vmatpush2.bf16.msra.mxu0 0
    %2202 = vmatprep.subr.bf16.mxu0 0
    %2203 = vmatpush2.bf16.msra.mxu0 0
    %2204 = vmatprep.subr.bf16.mxu0 0
    %2205 = vmatpush2.bf16.msra.mxu0 0
    %2206 = vmatprep.subr.bf16.mxu0 0
    %2207 = vmatpush2.bf16.msra.mxu0 0
    %2208 = vmatprep.subr.bf16.mxu0 0
    %2209 = vmatpush2.bf16.msra.mxu0 0
    %2210 = vmatprep.subr.bf16.mxu0 0
    %2211 = vmatpush2.bf16.msra.mxu0 0
    %2212 = vmatprep.mubr.bf16.mxu0 0
    %2213 = vmatmul.mubr.bf16.gmra.mxu0 %v2127
    %v2214 = vpop.f32.mrf.mxu0
    %v2215 = vadd.f32 %v2166, %v2214
    %v2216 = vpop.f32.mrf.mxu0
    %v2217 = vpop.f32.mrf.mxu0
    %v2218 = vadd.f32 %v2169, %v2217
    %v2219 = vpop.f32.mrf.mxu0
    %2220 = vmatprep.mubr.bf16.mxu0 0
    %2221 = vmatmul.mubr.bf16.gmra.mxu0 %v2130
    %v2222 = vpop.f32.mrf.mxu0
    %v2223 = vadd.f32 %v2174, %v2222
    %v2224 = vpop.f32.mrf.mxu0
    %v2225 = vpop.f32.mrf.mxu0
    %v2226 = vadd.f32 %v2177, %v2225
    %v2227 = vpop.f32.mrf.mxu0
    %2228 = vdwg.mxu0
    %v2229 = vadd.f32 %v2215, %v2015
    %v2230 = vadd.f32 %v2218, %v2018
    %v2231 = vadd.f32 %v2223, %v2015
    %v2232 = vadd.f32 %v2226, %v2018
    %v2233 = vadd.f32 %v2229, %v1671
    %v2234 = vadd.f32 %v2230, %v1671
    %v2235 = vadd.f32 %v2231, %v1671
    %v2236 = vadd.f32 %v2232, %v1671
    %v2237 = vtanh.pop %v2233
    %v2238 = vtanh.pop %v2234
    %v2239 = vtanh.pop %v2235
    %v2240 = vtanh.pop %v2236
    %v2241 = vsub.f32 1.0, %v2046
    %v2242 = vsub.f32 1.0, %v2048
    %v2243 = vsub.f32 1.0, %v2050
    %v2244 = vsub.f32 1.0, %v2052
    %v2245 = vmul.f32 %v2241, %v1692
    %v2246 = vmul.f32 %v2242, %v1693
    %v2247 = vmul.f32 %v2243, %v1694
    %v2248 = vmul.f32 %v2244, %v1695
    %v2249 = vmul.f32 %v2046, %v2237
    %v2250 = vmul.f32 %v2048, %v2238
    %v2251 = vmul.f32 %v2050, %v2239
    %v2252 = vmul.f32 %v2052, %v2240
    %v2253 = vadd.f32 %v2245, %v2249
    %v2254 = vadd.f32 %v2246, %v2250
    %v2255 = vadd.f32 %v2247, %v2251
    %v2256 = vadd.f32 %v2248, %v2252
    %v2261 = vrot.slane %v2253, 7
    %v2262 = vrot.slane %v2254, 7
    %v2263 = vsel %vm165, %v2261, %v2262
    %v2264 = vrot.slane %v2255, 7
    %v2265 = vsel %vm165, %v2262, %v2264
    %v2266 = vrot.slane %v2256, 7
    %v2267 = vsel %vm165, %v2264, %v2266
    %v2272 = vsel %vm165, 0.0, %v2261
    %v2273 = vmul.f32 %v2272, %v138
    %v2274 = vmul.f32 %v2263, %v139
    %v2275 = vmul.f32 %v2265, %v140
    %v2276 = vmul.f32 %v2267, %v141
    %v2277 = vrot.slane %v2253, 1
    %v2278 = vrot.slane %v2254, 1
    %v2279 = vsel %vm182, %v2277, %v2278
    %v2280 = vrot.slane %v2255, 1
    %v2281 = vsel %vm182, %v2278, %v2280
    %v2282 = vrot.slane %v2256, 1
    %v2283 = vsel %vm182, %v2280, %v2282
    %v2288 = vsel %vm182, %v2282, 0.0
    %v2289 = vmul.f32 %v2279, %v150
    %v2290 = vmul.f32 %v2281, %v151
    %v2291 = vmul.f32 %v2283, %v152
    %v2292 = vmul.f32 %v2288, %v153
    %v2293 = vpack.c.bf16 %v2274, %v2273
    %v2294 = vpack.c.bf16 %v2254, %v2253
    %v2295 = vpack.c.bf16 %v2290, %v2289
    %v2296 = vpack.c.bf16 %v2276, %v2275
    %v2297 = vpack.c.bf16 %v2256, %v2255
    %v2298 = vpack.c.bf16 %v2292, %v2291
    %v2299 = vadd.f32 %v2273, %v2275
    %v2300 = vadd.f32 %v2253, %v2255
    %v2301 = vadd.f32 %v2289, %v2291
    %v2302 = vadd.f32 %v2274, %v2276
    %v2303 = vadd.f32 %v2254, %v2256
    %v2304 = vadd.f32 %v2290, %v2292
    %v2305 = vpack.c.bf16 %v2302, %v2299
    %v2306 = vpack.c.bf16 %v2303, %v2300
    %v2307 = vpack.c.bf16 %v2304, %v2301
    %2308 = vmatprep.subr.bf16.mxu0 %v421
    %2309 = vmatpush1.bf16.msra.mxu0 %v420
    %2310 = vmatprep.subr.bf16.mxu0 %v419
    %2311 = vmatpush1.bf16.msra.mxu0 %v418
    %2312 = vmatprep.subr.bf16.mxu0 %v417
    %2313 = vmatpush1.bf16.msra.mxu0 %v416
    %2314 = vmatprep.subr.bf16.mxu0 %v415
    %2315 = vmatpush1.bf16.msra.mxu0 %v414
    %2316 = vmatprep.subr.bf16.mxu0 %v413
    %2317 = vmatpush1.bf16.msra.mxu0 %v412
    %2318 = vmatprep.subr.bf16.mxu0 %v411
    %2319 = vmatpush1.bf16.msra.mxu0 %v410
    %2320 = vmatprep.subr.bf16.mxu0 %v409
    %2321 = vmatpush1.bf16.msra.mxu0 %v408
    %2322 = vmatprep.subr.bf16.mxu0 %v407
    %2323 = vmatpush1.bf16.msra.mxu0 %v406
    %2324 = vmatprep.subr.bf16.mxu0 %v437
    %2325 = vmatpush2.bf16.msra.mxu0 %v436
    %2326 = vmatprep.subr.bf16.mxu0 %v435
    %2327 = vmatpush2.bf16.msra.mxu0 %v434
    %2328 = vmatprep.subr.bf16.mxu0 %v433
    %2329 = vmatpush2.bf16.msra.mxu0 %v432
    %2330 = vmatprep.subr.bf16.mxu0 %v431
    %2331 = vmatpush2.bf16.msra.mxu0 %v430
    %2332 = vmatprep.subr.bf16.mxu0 %v429
    %2333 = vmatpush2.bf16.msra.mxu0 %v428
    %2334 = vmatprep.subr.bf16.mxu0 %v427
    %2335 = vmatpush2.bf16.msra.mxu0 %v426
    %2336 = vmatprep.subr.bf16.mxu0 %v425
    %2337 = vmatpush2.bf16.msra.mxu0 %v424
    %2338 = vmatprep.subr.bf16.mxu0 %v423
    %2339 = vmatpush2.bf16.msra.mxu0 %v422
    %2340 = vmatprep.mubr.bf16.mxu0 %v2294
    %2341 = vmatmul.mubr.bf16.gmra.mxu0 %v2293
    %v2342 = vpop.f32.mrf.mxu0
    %v2343 = vadd.f32 0.0, %v2342
    %v2344 = vpop.f32.mrf.mxu0
    %v2345 = vadd.f32 0.0, %v2344
    %v2346 = vpop.f32.mrf.mxu0
    %v2347 = vadd.f32 0.0, %v2346
    %v2348 = vpop.f32.mrf.mxu0
    %v2349 = vadd.f32 0.0, %v2348
    %2350 = vmatprep.mubr.bf16.mxu0 %v2297
    %2351 = vmatmul.mubr.bf16.gmra.mxu0 %v2296
    %v2352 = vpop.f32.mrf.mxu0
    %v2353 = vadd.f32 0.0, %v2352
    %v2354 = vpop.f32.mrf.mxu0
    %v2355 = vadd.f32 0.0, %v2354
    %v2356 = vpop.f32.mrf.mxu0
    %v2357 = vadd.f32 0.0, %v2356
    %v2358 = vpop.f32.mrf.mxu0
    %v2359 = vadd.f32 0.0, %v2358
    %2360 = vdwg.mxu0
    %2361 = vmatprep.subr.bf16.mxu0 %v453
    %2362 = vmatpush1.bf16.msra.mxu0 %v452
    %2363 = vmatprep.subr.bf16.mxu0 %v451
    %2364 = vmatpush1.bf16.msra.mxu0 %v450
    %2365 = vmatprep.subr.bf16.mxu0 %v449
    %2366 = vmatpush1.bf16.msra.mxu0 %v448
    %2367 = vmatprep.subr.bf16.mxu0 %v447
    %2368 = vmatpush1.bf16.msra.mxu0 %v446
    %2369 = vmatprep.subr.bf16.mxu0 %v445
    %2370 = vmatpush1.bf16.msra.mxu0 %v444
    %2371 = vmatprep.subr.bf16.mxu0 %v443
    %2372 = vmatpush1.bf16.msra.mxu0 %v442
    %2373 = vmatprep.subr.bf16.mxu0 %v441
    %2374 = vmatpush1.bf16.msra.mxu0 %v440
    %2375 = vmatprep.subr.bf16.mxu0 %v439
    %2376 = vmatpush1.bf16.msra.mxu0 %v438
    %2377 = vmatprep.subr.bf16.mxu0 0
    %2378 = vmatpush2.bf16.msra.mxu0 0
    %2379 = vmatprep.subr.bf16.mxu0 0
    %2380 = vmatpush2.bf16.msra.mxu0 0
    %2381 = vmatprep.subr.bf16.mxu0 0
    %2382 = vmatpush2.bf16.msra.mxu0 0
    %2383 = vmatprep.subr.bf16.mxu0 0
    %2384 = vmatpush2.bf16.msra.mxu0 0
    %2385 = vmatprep.subr.bf16.mxu0 0
    %2386 = vmatpush2.bf16.msra.mxu0 0
    %2387 = vmatprep.subr.bf16.mxu0 0
    %2388 = vmatpush2.bf16.msra.mxu0 0
    %2389 = vmatprep.subr.bf16.mxu0 0
    %2390 = vmatpush2.bf16.msra.mxu0 0
    %2391 = vmatprep.subr.bf16.mxu0 0
    %2392 = vmatpush2.bf16.msra.mxu0 0
    %2393 = vmatprep.mubr.bf16.mxu0 0
    %2394 = vmatmul.mubr.bf16.gmra.mxu0 %v2295
    %v2395 = vpop.f32.mrf.mxu0
    %v2396 = vadd.f32 %v2343, %v2395
    %v2397 = vpop.f32.mrf.mxu0
    %v2398 = vadd.f32 %v2345, %v2397
    %v2399 = vpop.f32.mrf.mxu0
    %v2400 = vadd.f32 %v2347, %v2399
    %v2401 = vpop.f32.mrf.mxu0
    %v2402 = vadd.f32 %v2349, %v2401
    %2403 = vmatprep.mubr.bf16.mxu0 0
    %2404 = vmatmul.mubr.bf16.gmra.mxu0 %v2298
    %v2405 = vpop.f32.mrf.mxu0
    %v2406 = vadd.f32 %v2353, %v2405
    %v2407 = vpop.f32.mrf.mxu0
    %v2408 = vadd.f32 %v2355, %v2407
    %v2409 = vpop.f32.mrf.mxu0
    %v2410 = vadd.f32 %v2357, %v2409
    %v2411 = vpop.f32.mrf.mxu0
    %v2412 = vadd.f32 %v2359, %v2411
    %2413 = vdwg.mxu0
    %2414 = vmatprep.subr.bf16.mxu0 %v966
    %2415 = vmatpush1.bf16.msra.mxu0 %v965
    %2416 = vmatprep.subr.bf16.mxu0 %v963
    %2417 = vmatpush1.bf16.msra.mxu0 %v962
    %2418 = vmatprep.subr.bf16.mxu0 %v960
    %2419 = vmatpush1.bf16.msra.mxu0 %v959
    %2420 = vmatprep.subr.bf16.mxu0 %v957
    %2421 = vmatpush1.bf16.msra.mxu0 %v956
    %2422 = vmatprep.subr.bf16.mxu0 %v954
    %2423 = vmatpush1.bf16.msra.mxu0 %v953
    %2424 = vmatprep.subr.bf16.mxu0 %v951
    %2425 = vmatpush1.bf16.msra.mxu0 %v950
    %2426 = vmatprep.subr.bf16.mxu0 %v948
    %2427 = vmatpush1.bf16.msra.mxu0 %v947
    %2428 = vmatprep.subr.bf16.mxu0 %v945
    %2429 = vmatpush1.bf16.msra.mxu0 %v944
    %2430 = vmatprep.subr.bf16.mxu0 %v990
    %2431 = vmatpush2.bf16.msra.mxu0 %v989
    %2432 = vmatprep.subr.bf16.mxu0 %v987
    %2433 = vmatpush2.bf16.msra.mxu0 %v986
    %2434 = vmatprep.subr.bf16.mxu0 %v984
    %2435 = vmatpush2.bf16.msra.mxu0 %v983
    %2436 = vmatprep.subr.bf16.mxu0 %v981
    %2437 = vmatpush2.bf16.msra.mxu0 %v980
    %2438 = vmatprep.subr.bf16.mxu0 %v978
    %2439 = vmatpush2.bf16.msra.mxu0 %v977
    %2440 = vmatprep.subr.bf16.mxu0 %v975
    %2441 = vmatpush2.bf16.msra.mxu0 %v974
    %2442 = vmatprep.subr.bf16.mxu0 %v972
    %2443 = vmatpush2.bf16.msra.mxu0 %v971
    %2444 = vmatprep.subr.bf16.mxu0 %v969
    %2445 = vmatpush2.bf16.msra.mxu0 %v968
    %2446 = vmatprep.mubr.bf16.mxu0 %v2306
    %2447 = vmatmul.mubr.bf16.gmra.mxu0 %v2305
    %v2448 = vpop.f32.mrf.mxu0
    %v2449 = vadd.f32 0.0, %v2448
    %v2450 = vpop.f32.mrf.mxu0
    %v2451 = vadd.f32 0.0, %v2450
    %v2452 = vpop.f32.mrf.mxu0
    %v2453 = vadd.f32 0.0, %v2452
    %v2454 = vpop.f32.mrf.mxu0
    %v2455 = vadd.f32 0.0, %v2454
    %2456 = vdwg.mxu0
    %2457 = vmatprep.subr.bf16.mxu0 %v1014
    %2458 = vmatpush1.bf16.msra.mxu0 %v1013
    %2459 = vmatprep.subr.bf16.mxu0 %v1011
    %2460 = vmatpush1.bf16.msra.mxu0 %v1010
    %2461 = vmatprep.subr.bf16.mxu0 %v1008
    %2462 = vmatpush1.bf16.msra.mxu0 %v1007
    %2463 = vmatprep.subr.bf16.mxu0 %v1005
    %2464 = vmatpush1.bf16.msra.mxu0 %v1004
    %2465 = vmatprep.subr.bf16.mxu0 %v1002
    %2466 = vmatpush1.bf16.msra.mxu0 %v1001
    %2467 = vmatprep.subr.bf16.mxu0 %v999
    %2468 = vmatpush1.bf16.msra.mxu0 %v998
    %2469 = vmatprep.subr.bf16.mxu0 %v996
    %2470 = vmatpush1.bf16.msra.mxu0 %v995
    %2471 = vmatprep.subr.bf16.mxu0 %v993
    %2472 = vmatpush1.bf16.msra.mxu0 %v992
    %2473 = vmatprep.subr.bf16.mxu0 0
    %2474 = vmatpush2.bf16.msra.mxu0 0
    %2475 = vmatprep.subr.bf16.mxu0 0
    %2476 = vmatpush2.bf16.msra.mxu0 0
    %2477 = vmatprep.subr.bf16.mxu0 0
    %2478 = vmatpush2.bf16.msra.mxu0 0
    %2479 = vmatprep.subr.bf16.mxu0 0
    %2480 = vmatpush2.bf16.msra.mxu0 0
    %2481 = vmatprep.subr.bf16.mxu0 0
    %2482 = vmatpush2.bf16.msra.mxu0 0
    %2483 = vmatprep.subr.bf16.mxu0 0
    %2484 = vmatpush2.bf16.msra.mxu0 0
    %2485 = vmatprep.subr.bf16.mxu0 0
    %2486 = vmatpush2.bf16.msra.mxu0 0
    %2487 = vmatprep.subr.bf16.mxu0 0
    %2488 = vmatpush2.bf16.msra.mxu0 0
    %2489 = vmatprep.mubr.bf16.mxu0 0
    %2490 = vmatmul.mubr.bf16.gmra.mxu0 %v2307
    %v2491 = vpop.f32.mrf.mxu0
    %v2492 = vadd.f32 %v2449, %v2491
    %v2493 = vpop.f32.mrf.mxu0
    %v2494 = vadd.f32 %v2451, %v2493
    %v2495 = vpop.f32.mrf.mxu0
    %v2496 = vadd.f32 %v2453, %v2495
    %v2497 = vpop.f32.mrf.mxu0
    %v2498 = vadd.f32 %v2455, %v2497
    %2499 = vdwg.mxu0
    %2500 = vmatprep.subr.bf16.mxu0 0
    %2501 = vmatpush1.bf16.msra.mxu0 %v967
    %2502 = vmatprep.subr.bf16.mxu0 0
    %2503 = vmatpush1.bf16.msra.mxu0 %v964
    %2504 = vmatprep.subr.bf16.mxu0 0
    %2505 = vmatpush1.bf16.msra.mxu0 %v961
    %2506 = vmatprep.subr.bf16.mxu0 0
    %2507 = vmatpush1.bf16.msra.mxu0 %v958
    %2508 = vmatprep.subr.bf16.mxu0 0
    %2509 = vmatpush1.bf16.msra.mxu0 %v955
    %2510 = vmatprep.subr.bf16.mxu0 0
    %2511 = vmatpush1.bf16.msra.mxu0 %v952
    %2512 = vmatprep.subr.bf16.mxu0 0
    %2513 = vmatpush1.bf16.msra.mxu0 %v949
    %2514 = vmatprep.subr.bf16.mxu0 0
    %2515 = vmatpush1.bf16.msra.mxu0 %v946
    %2516 = vmatprep.subr.bf16.mxu0 0
    %2517 = vmatpush2.bf16.msra.mxu0 %v991
    %2518 = vmatprep.subr.bf16.mxu0 0
    %2519 = vmatpush2.bf16.msra.mxu0 %v988
    %2520 = vmatprep.subr.bf16.mxu0 0
    %2521 = vmatpush2.bf16.msra.mxu0 %v985
    %2522 = vmatprep.subr.bf16.mxu0 0
    %2523 = vmatpush2.bf16.msra.mxu0 %v982
    %2524 = vmatprep.subr.bf16.mxu0 0
    %2525 = vmatpush2.bf16.msra.mxu0 %v979
    %2526 = vmatprep.subr.bf16.mxu0 0
    %2527 = vmatpush2.bf16.msra.mxu0 %v976
    %2528 = vmatprep.subr.bf16.mxu0 0
    %2529 = vmatpush2.bf16.msra.mxu0 %v973
    %2530 = vmatprep.subr.bf16.mxu0 0
    %2531 = vmatpush2.bf16.msra.mxu0 %v970
    %2532 = vmatprep.mubr.bf16.mxu0 %v2306
    %2533 = vmatmul.mubr.bf16.gmra.mxu0 %v2305
    %v2534 = vpop.f32.mrf.mxu0
    %v2535 = vadd.f32 0.0, %v2534
    %v2536 = vpop.f32.mrf.mxu0
    %v2537 = vpop.f32.mrf.mxu0
    %v2538 = vadd.f32 0.0, %v2537
    %v2539 = vpop.f32.mrf.mxu0
    %2540 = vdwg.mxu0
    %2541 = vmatprep.subr.bf16.mxu0 0
    %2542 = vmatpush1.bf16.msra.mxu0 %v1015
    %2543 = vmatprep.subr.bf16.mxu0 0
    %2544 = vmatpush1.bf16.msra.mxu0 %v1012
    %2545 = vmatprep.subr.bf16.mxu0 0
    %2546 = vmatpush1.bf16.msra.mxu0 %v1009
    %2547 = vmatprep.subr.bf16.mxu0 0
    %2548 = vmatpush1.bf16.msra.mxu0 %v1006
    %2549 = vmatprep.subr.bf16.mxu0 0
    %2550 = vmatpush1.bf16.msra.mxu0 %v1003
    %2551 = vmatprep.subr.bf16.mxu0 0
    %2552 = vmatpush1.bf16.msra.mxu0 %v1000
    %2553 = vmatprep.subr.bf16.mxu0 0
    %2554 = vmatpush1.bf16.msra.mxu0 %v997
    %2555 = vmatprep.subr.bf16.mxu0 0
    %2556 = vmatpush1.bf16.msra.mxu0 %v994
    %2557 = vmatprep.subr.bf16.mxu0 0
    %2558 = vmatpush2.bf16.msra.mxu0 0
    %2559 = vmatprep.subr.bf16.mxu0 0
    %2560 = vmatpush2.bf16.msra.mxu0 0
    %2561 = vmatprep.subr.bf16.mxu0 0
    %2562 = vmatpush2.bf16.msra.mxu0 0
    %2563 = vmatprep.subr.bf16.mxu0 0
    %2564 = vmatpush2.bf16.msra.mxu0 0
    %2565 = vmatprep.subr.bf16.mxu0 0
    %2566 = vmatpush2.bf16.msra.mxu0 0
    %2567 = vmatprep.subr.bf16.mxu0 0
    %2568 = vmatpush2.bf16.msra.mxu0 0
    %2569 = vmatprep.subr.bf16.mxu0 0
    %2570 = vmatpush2.bf16.msra.mxu0 0
    %2571 = vmatprep.subr.bf16.mxu0 0
    %2572 = vmatpush2.bf16.msra.mxu0 0
    %2573 = vmatprep.mubr.bf16.mxu0 0
    %2574 = vmatmul.mubr.bf16.gmra.mxu0 %v2307
    %v2575 = vpop.f32.mrf.mxu0
    %v2576 = vadd.f32 %v2535, %v2575
    %v2577 = vpop.f32.mrf.mxu0
    %v2578 = vpop.f32.mrf.mxu0
    %v2579 = vadd.f32 %v2538, %v2578
    %v2580 = vpop.f32.mrf.mxu0
    %2581 = vdwg.mxu0
    %v2582 = vadd.f32 %v2396, %v2492
    %v2583 = vadd.f32 %v2400, %v2496
    %v2584 = vadd.f32 %v2406, %v2492
    %v2585 = vadd.f32 %v2410, %v2496
    %v2586 = vadd.f32 %v2582, %v1263
    %v2587 = vadd.f32 %v2583, %v1263
    %v2588 = vadd.f32 %v2584, %v1263
    %v2589 = vadd.f32 %v2585, %v1263
    %v2590 = vxor.u32 %v2586, 2147483648
    %v2591 = vxor.u32 %v2587, 2147483648
    %v2592 = vxor.u32 %v2588, 2147483648
    %v2593 = vxor.u32 %v2589, 2147483648
    %v2594 = vmul.f32 %v2590, 1.442695
    %v2595 = vpow.pop %v2594
    %v2596 = vmul.f32 %v2591, 1.442695
    %v2597 = vpow.pop %v2596
    %v2598 = vmul.f32 %v2592, 1.442695
    %v2599 = vpow.pop %v2598
    %v2600 = vmul.f32 %v2593, 1.442695
    %v2601 = vpow.pop %v2600
    %v2602 = vadd.f32 %v2595, 1.0
    %v2603 = vadd.f32 %v2597, 1.0
    %v2604 = vadd.f32 %v2599, 1.0
    %v2605 = vadd.f32 %v2601, 1.0
    %v2606 = vrcp.pop %v2602
    %v2607 = vmul.f32 1.0, %v2606
    %v2608 = vrcp.pop %v2603
    %v2609 = vmul.f32 1.0, %v2608
    %v2610 = vrcp.pop %v2604
    %v2611 = vmul.f32 1.0, %v2610
    %v2612 = vrcp.pop %v2605
    %v2613 = vmul.f32 1.0, %v2612
    %v2614 = vadd.f32 %v2398, %v2494
    %v2615 = vadd.f32 %v2402, %v2498
    %v2616 = vadd.f32 %v2408, %v2494
    %v2617 = vadd.f32 %v2412, %v2498
    %v2618 = vadd.f32 %v2614, %v1299
    %v2619 = vadd.f32 %v2615, %v1299
    %v2620 = vadd.f32 %v2616, %v1299
    %v2621 = vadd.f32 %v2617, %v1299
    %v2622 = vxor.u32 %v2618, 2147483648
    %v2623 = vxor.u32 %v2619, 2147483648
    %v2624 = vxor.u32 %v2620, 2147483648
    %v2625 = vxor.u32 %v2621, 2147483648
    %v2626 = vmul.f32 %v2622, 1.442695
    %v2627 = vpow.pop %v2626
    %v2628 = vmul.f32 %v2623, 1.442695
    %v2629 = vpow.pop %v2628
    %v2630 = vmul.f32 %v2624, 1.442695
    %v2631 = vpow.pop %v2630
    %v2632 = vmul.f32 %v2625, 1.442695
    %v2633 = vpow.pop %v2632
    %v2634 = vadd.f32 %v2627, 1.0
    %v2635 = vadd.f32 %v2629, 1.0
    %v2636 = vadd.f32 %v2631, 1.0
    %v2637 = vadd.f32 %v2633, 1.0
    %v2638 = vrcp.pop %v2634
    %v2639 = vmul.f32 1.0, %v2638
    %v2640 = vrcp.pop %v2635
    %v2641 = vmul.f32 1.0, %v2640
    %v2642 = vrcp.pop %v2636
    %v2643 = vmul.f32 1.0, %v2642
    %v2644 = vrcp.pop %v2637
    %v2645 = vmul.f32 1.0, %v2644
    %v2646 = vmul.f32 %v2639, %v2253
    %v2647 = vmul.f32 %v2641, %v2254
    %v2648 = vmul.f32 %v2643, %v2255
    %v2649 = vmul.f32 %v2645, %v2256
    %v2654 = vrot.slane %v2646, 7
    %v2655 = vrot.slane %v2647, 7
    %v2656 = vsel %vm165, %v2654, %v2655
    %v2657 = vrot.slane %v2648, 7
    %v2658 = vsel %vm165, %v2655, %v2657
    %v2659 = vrot.slane %v2649, 7
    %v2660 = vsel %vm165, %v2657, %v2659
    %v2665 = vsel %vm165, 0.0, %v2654
    %v2666 = vmul.f32 %v2665, %v138
    %v2667 = vmul.f32 %v2656, %v139
    %v2668 = vmul.f32 %v2658, %v140
    %v2669 = vmul.f32 %v2660, %v141
    %v2670 = vrot.slane %v2646, 1
    %v2671 = vrot.slane %v2647, 1
    %v2672 = vsel %vm182, %v2670, %v2671
    %v2673 = vrot.slane %v2648, 1
    %v2674 = vsel %vm182, %v2671, %v2673
    %v2675 = vrot.slane %v2649, 1
    %v2676 = vsel %vm182, %v2673, %v2675
    %v2681 = vsel %vm182, %v2675, 0.0
    %v2682 = vmul.f32 %v2672, %v150
    %v2683 = vmul.f32 %v2674, %v151
    %v2684 = vmul.f32 %v2676, %v152
    %v2685 = vmul.f32 %v2681, %v153
    %v2686 = vpack.c.bf16 %v2667, %v2666
    %v2687 = vpack.c.bf16 %v2647, %v2646
    %v2688 = vpack.c.bf16 %v2683, %v2682
    %v2689 = vpack.c.bf16 %v2669, %v2668
    %v2690 = vpack.c.bf16 %v2649, %v2648
    %v2691 = vpack.c.bf16 %v2685, %v2684
    %2692 = vmatprep.subr.bf16.mxu0 0
    %2693 = vmatpush1.bf16.msra.mxu0 %v1525
    %2694 = vmatprep.subr.bf16.mxu0 0
    %2695 = vmatpush1.bf16.msra.mxu0 %v1524
    %2696 = vmatprep.subr.bf16.mxu0 0
    %2697 = vmatpush1.bf16.msra.mxu0 %v1523
    %2698 = vmatprep.subr.bf16.mxu0 0
    %2699 = vmatpush1.bf16.msra.mxu0 %v1522
    %2700 = vmatprep.subr.bf16.mxu0 0
    %2701 = vmatpush1.bf16.msra.mxu0 %v1521
    %2702 = vmatprep.subr.bf16.mxu0 0
    %2703 = vmatpush1.bf16.msra.mxu0 %v1520
    %2704 = vmatprep.subr.bf16.mxu0 0
    %2705 = vmatpush1.bf16.msra.mxu0 %v1519
    %2706 = vmatprep.subr.bf16.mxu0 0
    %2707 = vmatpush1.bf16.msra.mxu0 %v1518
    %2708 = vmatprep.subr.bf16.mxu0 0
    %2709 = vmatpush2.bf16.msra.mxu0 %v1533
    %2710 = vmatprep.subr.bf16.mxu0 0
    %2711 = vmatpush2.bf16.msra.mxu0 %v1532
    %2712 = vmatprep.subr.bf16.mxu0 0
    %2713 = vmatpush2.bf16.msra.mxu0 %v1531
    %2714 = vmatprep.subr.bf16.mxu0 0
    %2715 = vmatpush2.bf16.msra.mxu0 %v1530
    %2716 = vmatprep.subr.bf16.mxu0 0
    %2717 = vmatpush2.bf16.msra.mxu0 %v1529
    %2718 = vmatprep.subr.bf16.mxu0 0
    %2719 = vmatpush2.bf16.msra.mxu0 %v1528
    %2720 = vmatprep.subr.bf16.mxu0 0
    %2721 = vmatpush2.bf16.msra.mxu0 %v1527
    %2722 = vmatprep.subr.bf16.mxu0 0
    %2723 = vmatpush2.bf16.msra.mxu0 %v1526
    %2724 = vmatprep.mubr.bf16.mxu0 %v2687
    %2725 = vmatmul.mubr.bf16.gmra.mxu0 %v2686
    %v2726 = vpop.f32.mrf.mxu0
    %v2727 = vadd.f32 0.0, %v2726
    %v2728 = vpop.f32.mrf.mxu0
    %v2729 = vpop.f32.mrf.mxu0
    %v2730 = vadd.f32 0.0, %v2729
    %v2731 = vpop.f32.mrf.mxu0
    %2732 = vmatprep.mubr.bf16.mxu0 %v2690
    %2733 = vmatmul.mubr.bf16.gmra.mxu0 %v2689
    %v2734 = vpop.f32.mrf.mxu0
    %v2735 = vadd.f32 0.0, %v2734
    %v2736 = vpop.f32.mrf.mxu0
    %v2737 = vpop.f32.mrf.mxu0
    %v2738 = vadd.f32 0.0, %v2737
    %v2739 = vpop.f32.mrf.mxu0
    %2740 = vdwg.mxu0
    %2741 = vmatprep.subr.bf16.mxu0 0
    %2742 = vmatpush1.bf16.msra.mxu0 %v1541
    %2743 = vmatprep.subr.bf16.mxu0 0
    %2744 = vmatpush1.bf16.msra.mxu0 %v1540
    %2745 = vmatprep.subr.bf16.mxu0 0
    %2746 = vmatpush1.bf16.msra.mxu0 %v1539
    %2747 = vmatprep.subr.bf16.mxu0 0
    %2748 = vmatpush1.bf16.msra.mxu0 %v1538
    %2749 = vmatprep.subr.bf16.mxu0 0
    %2750 = vmatpush1.bf16.msra.mxu0 %v1537
    %2751 = vmatprep.subr.bf16.mxu0 0
    %2752 = vmatpush1.bf16.msra.mxu0 %v1536
    %2753 = vmatprep.subr.bf16.mxu0 0
    %2754 = vmatpush1.bf16.msra.mxu0 %v1535
    %2755 = vmatprep.subr.bf16.mxu0 0
    %2756 = vmatpush1.bf16.msra.mxu0 %v1534
    %2757 = vmatprep.subr.bf16.mxu0 0
    %2758 = vmatpush2.bf16.msra.mxu0 0
    %2759 = vmatprep.subr.bf16.mxu0 0
    %2760 = vmatpush2.bf16.msra.mxu0 0
    %2761 = vmatprep.subr.bf16.mxu0 0
    %2762 = vmatpush2.bf16.msra.mxu0 0
    %2763 = vmatprep.subr.bf16.mxu0 0
    %2764 = vmatpush2.bf16.msra.mxu0 0
    %2765 = vmatprep.subr.bf16.mxu0 0
    %2766 = vmatpush2.bf16.msra.mxu0 0
    %2767 = vmatprep.subr.bf16.mxu0 0
    %2768 = vmatpush2.bf16.msra.mxu0 0
    %2769 = vmatprep.subr.bf16.mxu0 0
    %2770 = vmatpush2.bf16.msra.mxu0 0
    %2771 = vmatprep.subr.bf16.mxu0 0
    %2772 = vmatpush2.bf16.msra.mxu0 0
    %2773 = vmatprep.mubr.bf16.mxu0 0
    %2774 = vmatmul.mubr.bf16.gmra.mxu0 %v2688
    %v2775 = vpop.f32.mrf.mxu0
    %v2776 = vadd.f32 %v2727, %v2775
    %v2777 = vpop.f32.mrf.mxu0
    %v2778 = vpop.f32.mrf.mxu0
    %v2779 = vadd.f32 %v2730, %v2778
    %v2780 = vpop.f32.mrf.mxu0
    %2781 = vmatprep.mubr.bf16.mxu0 0
    %2782 = vmatmul.mubr.bf16.gmra.mxu0 %v2691
    %v2783 = vpop.f32.mrf.mxu0
    %v2784 = vadd.f32 %v2735, %v2783
    %v2785 = vpop.f32.mrf.mxu0
    %v2786 = vpop.f32.mrf.mxu0
    %v2787 = vadd.f32 %v2738, %v2786
    %v2788 = vpop.f32.mrf.mxu0
    %2789 = vdwg.mxu0
    %v2790 = vadd.f32 %v2776, %v2576
    %v2791 = vadd.f32 %v2779, %v2579
    %v2792 = vadd.f32 %v2784, %v2576
    %v2793 = vadd.f32 %v2787, %v2579
    %v2794 = vadd.f32 %v2790, %v1671
    %v2795 = vadd.f32 %v2791, %v1671
    %v2796 = vadd.f32 %v2792, %v1671
    %v2797 = vadd.f32 %v2793, %v1671
    %v2798 = vtanh.pop %v2794
    %v2799 = vtanh.pop %v2795
    %v2800 = vtanh.pop %v2796
    %v2801 = vtanh.pop %v2797
    %v2802 = vsub.f32 1.0, %v2607
    %v2803 = vsub.f32 1.0, %v2609
    %v2804 = vsub.f32 1.0, %v2611
    %v2805 = vsub.f32 1.0, %v2613
    %v2806 = vmul.f32 %v2802, %v2253
    %v2807 = vmul.f32 %v2803, %v2254
    %v2808 = vmul.f32 %v2804, %v2255
    %v2809 = vmul.f32 %v2805, %v2256
    %v2810 = vmul.f32 %v2607, %v2798
    %v2811 = vmul.f32 %v2609, %v2799
    %v2812 = vmul.f32 %v2611, %v2800
    %v2813 = vmul.f32 %v2613, %v2801
    %v2814 = vadd.f32 %v2806, %v2810
    %v2815 = vadd.f32 %v2807, %v2811
    %v2816 = vadd.f32 %v2808, %v2812
    %v2817 = vadd.f32 %v2809, %v2813
    %2818 = vst [vmem:[#allocation10] sm:$0xff] %v2814
    %2819 = vst [vmem:[#allocation10 + $0x8] sm:$0xff] %v2815
    %2820 = vst [vmem:[#allocation10 + $0x10] sm:$0xff] %v2816
    %2821 = vst [vmem:[#allocation10 + $0x18] sm:$0xff] %v2817
    // Predicated region
    $region38: #{tpu_custom_call.1} parent=1 // pred_check
      _
    $region39: #{tpu_custom_call.1} parent=1 // pred_check_branch
      %2823 = sbr.rel (0) target = $region41
    $region40: #{tpu_custom_call.1} parent=1 // pred_region
      %s2825 = ssub.s32 512, 512
      %2826 = vsyncadd [#allocation4], %s2825
      %s2827 = sshll.u32 [#allocation10], 4
      %s2828 = int_to_ptr.vmem [resolvable:$true] %s2827
      %2833 = dma.vmem_to_hbm [thread:$0]  %s2828, 512, %s5, [#allocation4], 128, 128, 8
    $region41: #{tpu_custom_call.1} parent=1 // pred_fallthru
      _
    // Predicated region
    $region42: #{tpu_custom_call.1} parent=1 // pred_check
      _
    $region43: #{tpu_custom_call.1} parent=1 // pred_check_branch
      %2835 = sbr.rel (0) target = $region45
    $region44: #{tpu_custom_call.1} parent=1 // pred_region
      %2836 = dma.done [#allocation4], 512
    $region45: #{tpu_custom_call.1} parent=1 // pred_fallthru
      _
    %2837 = vsyncpa [#allocation3], 1
    %2838 = vsyncpa [#allocation6], 1
    %2839 = vsyncpa [#allocation9], 1
    %2840 = vsyncpa [#allocation4], 1

</llo_original>
